<compile_context>
chip_gen: v6e
topology: v6e:2x2x1
jax: 0.10.0
libtpu: 0.0.40
codegen_flags: <defaults>
</compile_context>

<pallas_src>
import numpy as np
import jax
import jax.numpy as jnp
from jax import lax
from jax.experimental import pallas as pl
from jax.experimental.pallas import tpu as pltpu

EPS = 1e-5


def _floor_div(x, d):
    # floor(x / d) for exact-integer-valued f32 x (requires |x| < 2^22) and python int d > 0.
    # Uses only iota/mul/floor — guaranteed VPU lowering (no vector integer division).
    return jnp.floor((x + 0.5) * (1.0 / d))


# ---------------------------------------------------------------------------
# Fused kernel: upsample (convT 2x2 s2) + pad + conv3x3 + BN(eval) + ReLU + conv1x1
# ---------------------------------------------------------------------------
def _make_fused_kernel(*, Co, Co_pad, NB, H, W, pad_top, pad_left):
    HW = H * W
    lanes = NB * HW

    def kernel(x_ref, wup_ref, bt_ref, w3s_ref, shift_ref, w1_ref, b1_ref,
               o_ref, s9_ref):
        # x_ref    : [Ci, NB*HW]      nearest-source gathered input, channel-major, spatial+batch on lanes
        # wup_ref  : [4*Co, Ci]       ConvTranspose2d weight, 4 taps stacked on output rows
        # bt_ref   : [Co, 1]          ConvTranspose2d bias
        # w3s_ref  : [Co, 9*Co_pad]   3x3 conv weight (BN scale folded), 9 taps stacked on K
        # shift_ref: [Co, 1]          folded BatchNorm shift (conv bias folded in)
        # w1_ref   : [Coo, Co]        final 1x1 conv weight
        # b1_ref   : [Coo, 1]         final 1x1 conv bias
        # o_ref    : [NB, Coo, HW]    lane-dense output (free reshape to NCHW)
        # s9_ref   : [9*Co_pad, NB*HW] f32 scratch holding the 9 rolled+masked copies of u
        f32 = jnp.float32

        # ---- per-lane row/col indices + masks, generated in-kernel (no DMA'd masks) ----
        q = lax.broadcasted_iota(jnp.int32, (1, lanes), 1).astype(f32)
        rg = _floor_div(q, W)                      # global row = n*H + r
        c = q - W * rg                             # column within image, in [0, W)
        r = rg - H * _floor_div(rg, H)             # row within image, in [0, H)
        rr = r - pad_top
        cc = c - pad_left
        inside = jnp.where((rr >= 0) & (cc >= 0), 1.0, 0.0)      # lanes covered by the upsample
        kh_par = rr - 2.0 * jnp.floor((rr + 0.5) * 0.5)           # rr mod 2
        kw_par = cc - 2.0 * jnp.floor((cc + 0.5) * 0.5)           # cc mod 2

        # ---- ConvTranspose2d(k=2, s=2) + F.pad: one K-stacked matmul + per-lane tap select ----
        taps = jnp.dot(wup_ref[...], x_ref[...],
                       preferred_element_type=f32)                # [4*Co, lanes]
        u = bt_ref[...] * inside                                  # bias only on covered lanes
        for kh in range(2):
            for kw in range(2):
                t = kh * 2 + kw
                sel = inside * jnp.where((kh_par == kh) & (kw_par == kw), 1.0, 0.0)
                u = u + sel * taps[t * Co:(t + 1) * Co, :]        # [Co, lanes]

        # ---- Conv2d(3x3, padding=1): 8 lane rolls (XLU) + ONE K=9*Co matmul ----
        if Co_pad != Co:
            # rows [Co, Co_pad) of each slab are never written; matching weight columns are 0,
            # so clear them once to avoid 0 * garbage(NaN).
            s9_ref[...] = jnp.zeros(s9_ref.shape, s9_ref.dtype)
        s = 0
        for dr in (-1, 0, 1):
            for dc in (-1, 0, 1):
                d = dr * W + dc
                tap = u if d == 0 else pltpu.roll(u, shift=(-d) % lanes, axis=1)
                if d != 0:
                    valid = jnp.where((r + dr >= 0) & (r + dr < H) &
                                      (c + dc >= 0) & (c + dc < W), 1.0, 0.0)
                    tap = tap * valid                              # zero edge / cross-image lanes
                s9_ref[pl.ds(s * Co_pad, Co), :] = tap
                s += 1
        acc = jnp.dot(w3s_ref[...], s9_ref[...].astype(w3s_ref.dtype),
                      preferred_element_type=f32)                  # [Co, lanes]

        # ---- BatchNorm (eval mode; scale pre-folded into w3) + ReLU ----
        y = jnp.maximum(acc + shift_ref[...], 0.0)

        # ---- final Conv2d(1x1) ----
        out = jnp.dot(w1_ref[...], y.astype(w1_ref.dtype),
                      preferred_element_type=f32) + b1_ref[...]    # [Coo, lanes]
        for nb in range(NB):
            o_ref[nb] = out[:, nb * HW:(nb + 1) * HW]

    return kernel


# ---------------------------------------------------------------------------
# Full forward (NCHW in / NCHW out, matching PyTorch semantics)
# ---------------------------------------------------------------------------
def out_conv_forward(x1_nchw, x2_nchw, p, *, compute_dtype=jnp.bfloat16,
                     images_per_step=None):
    N, Ci, H1, W1 = x1_nchw.shape
    Co = p["wt"].shape[1]
    Coo = p["w1"].shape[0]
    assert Ci == Co, "out_conv requires ci == co (conv3x3_bn(ci, co) is applied to a co-channel tensor)"

    # Faithful to the module's F.pad(x1, (diffX, 0, diffY, 0)):
    #   diffX = x2.H - up.H left-pads the W axis, diffY = x2.W - up.W top-pads the H axis.
    pad_left = x2_nchw.shape[2] - 2 * H1        # diffX
    pad_top = x2_nchw.shape[3] - 2 * W1         # diffY
    assert pad_left >= 0 and pad_top >= 0
    H, W = 2 * H1 + pad_top, 2 * W1 + pad_left
    HW = H * W

    NB = N if images_per_step is None else images_per_step   # images folded into the lane axis per step
    assert N % NB == 0
    G = N // NB
    lanes = NB * HW
    assert G == 1 or lanes % 128 == 0, "per-step lane block must be 128-aligned when G > 1"
    assert N * HW < (1 << 22), "float lane-index trick limit; TODO(synk): band spatially beyond this"
    Co_pad = -(-Co // 8) * 8                                   # 8-sublane-aligned slabs in the K stack

    cdt = compute_dtype
    f32 = jnp.float32

    # ---- input plumbing: nearest-source gather == upsample+pad index map (pure layout work) ----
    ri = jnp.maximum(jnp.arange(H) - pad_top, 0) // 2
    cj = jnp.maximum(jnp.arange(W) - pad_left, 0) // 2
    x_up = jnp.take(jnp.take(x1_nchw, ri, axis=2), cj, axis=3)            # [N, Ci, H, W]
    x_up = x_up.transpose(1, 0, 2, 3).reshape(Ci, N * HW).astype(cdt)     # channel-major, batch+spatial on lanes

    # ---- weight-sized constants only (no activation-sized operands into the kernel) ----
    # ConvTranspose2d weight (torch [Ci, Co, 2, 2]) -> taps stacked on output rows [4*Co, Ci]
    wup = jnp.transpose(p["wt"], (2, 3, 1, 0)).reshape(4 * Co, Ci).astype(cdt)
    bt = p["bt"].astype(f32)[:, None]

    # Folded BatchNorm (eval): scale into the 3x3 weights, bias/mean/beta into the shift.
    scale = p["gamma"] / jnp.sqrt(p["var"] + EPS)
    w3f = (p["w3"] * scale[:, None, None, None]).transpose(0, 2, 3, 1).reshape(Co, 9, Co)
    w3s = jnp.zeros((Co, 9, Co_pad), f32).at[:, :, :Co].set(w3f)
    w3s = w3s.reshape(Co, 9 * Co_pad).astype(cdt)
    shift = (p["beta"] + (p["b3"] - p["mean"]) * scale).astype(f32)[:, None]

    w1 = p["w1"].reshape(Coo, Co).astype(cdt)
    b1 = p["b1"].astype(f32)[:, None]

    kernel = _make_fused_kernel(Co=Co, Co_pad=Co_pad, NB=NB, H=H, W=W,
                                pad_top=pad_top, pad_left=pad_left)

    out_flat = pl.pallas_call(
        kernel,
        out_shape=jax.ShapeDtypeStruct((N, Coo, HW), f32),
        grid=(G,),
        in_specs=[
            pl.BlockSpec((Ci, lanes), lambda g: (0, g)),
            pl.BlockSpec((4 * Co, Ci), lambda g: (0, 0)),
            pl.BlockSpec((Co, 1), lambda g: (0, 0)),
            pl.BlockSpec((Co, 9 * Co_pad), lambda g: (0, 0)),
            pl.BlockSpec((Co, 1), lambda g: (0, 0)),
            pl.BlockSpec((Coo, Co), lambda g: (0, 0)),
            pl.BlockSpec((Coo, 1), lambda g: (0, 0)),
        ],
        out_specs=pl.BlockSpec((NB, Coo, HW), lambda g: (g, 0, 0)),
        scratch_shapes=[pltpu.VMEM((9 * Co_pad, lanes), f32)],
        compiler_params=pltpu.CompilerParams(
            dimension_semantics=("parallel",),     # grid steps (image groups) shard across TCs on v7x
        ),
    )(x_up, wup, bt, w3s, shift, w1, b1)

    # [N, Coo, H*W] is already channel-major per image -> NCHW via a free contiguous reshape.
    return out_flat.reshape(N, Coo, H, W)


# ---------------------------------------------------------------------------
# Pure-JAX reference (independent code path, for correctness check)
# ---------------------------------------------------------------------------
def ref_forward(x1, x2, p):
    N, Ci, H, W = x1.shape
    Co = p["wt"].shape[1]
    Coo = p["w1"].shape[0]
    up = jnp.einsum("ncij,cokl->noikjl", x1, p["wt"]).reshape(N, Co, 2 * H, 2 * W)
    up = up + p["bt"][None, :, None, None]
    diffX = x2.shape[2] - up.shape[2]
    diffY = x2.shape[3] - up.shape[3]
    up = jnp.pad(up, ((0, 0), (0, 0), (diffY, 0), (diffX, 0)))
    conv = lax.conv_general_dilated(
        up, p["w3"], window_strides=(1, 1), padding=((1, 1), (1, 1)),
        dimension_numbers=("NCHW", "OIHW", "NCHW"),
    ) + p["b3"][None, :, None, None]
    bn = (conv - p["mean"][None, :, None, None]) / jnp.sqrt(
        p["var"][None, :, None, None] + EPS
    )
    bn = bn * p["gamma"][None, :, None, None] + p["beta"][None, :, None, None]
    y = jnp.maximum(bn, 0.0)
    out = jnp.einsum("nchw,oc->nohw", y, p["w1"].reshape(Coo, Co))
    return out + p["b1"][None, :, None, None]


if __name__ == "__main__":
    # Module forward is only valid when ci == co (self.conv is conv3x3_bn(ci, co)).
    ci, co, coo = 4, 4, 3
    N, H1, W1 = 2, 7, 7       # x1 spatial -> upsampled to 14x14
    H2, W2 = 16, 16           # x2 spatial -> padded to 16x16 (H*W = 256 lanes per image)

    keys = jax.random.split(jax.random.PRNGKey(0), 12)
    x1 = jax.random.normal(keys[0], (N, ci, H1, W1), jnp.float32)
    x2 = jax.random.normal(keys[1], (N, ci, H2, W2), jnp.float32)  # only spatial dims used

    params = dict(
        wt=0.2 * jax.random.normal(keys[2], (ci, co, 2, 2), jnp.float32),   # ConvTranspose2d weight
        bt=0.1 * jax.random.normal(keys[3], (co,), jnp.float32),
        w3=0.2 * jax.random.normal(keys[4], (co, ci, 3, 3), jnp.float32),   # Conv2d(ci, co, 3) weight
        b3=0.1 * jax.random.normal(keys[5], (co,), jnp.float32),
        gamma=1.0 + 0.1 * jax.random.normal(keys[6], (co,), jnp.float32),   # BatchNorm2d params
        beta=0.1 * jax.random.normal(keys[7], (co,), jnp.float32),
        mean=0.1 * jax.random.normal(keys[8], (co,), jnp.float32),
        var=jax.random.uniform(keys[9], (co,), jnp.float32, 0.5, 1.5),
        w1=0.2 * jax.random.normal(keys[10], (coo, co, 1, 1), jnp.float32), # Conv2d(co, coo, 1) weight
        b1=0.1 * jax.random.normal(keys[11], (coo,), jnp.float32),
    )

    ref = jax.block_until_ready(ref_forward(x1, x2, params))

    # Exact-math path (f32 MXU operands): tight check against the independent reference.
    out_f32 = jax.block_until_ready(
        out_conv_forward(x1, x2, params, compute_dtype=jnp.float32))
    assert out_f32.shape == (N, coo, H2, W2), out_f32.shape
    np.testing.assert_allclose(np.asarray(out_f32), np.asarray(ref), rtol=1e-4, atol=1e-4)

    # Perf-default path (bf16 MXU operands, f32 accumulation): looser tolerance for bf16 rounding.
    out_bf16 = jax.block_until_ready(out_conv_forward(x1, x2, params))
    assert out_bf16.shape == (N, coo, H2, W2), out_bf16.shape
    np.testing.assert_allclose(np.asarray(out_bf16), np.asarray(ref), rtol=6e-2, atol=6e-2)

    print("KERNEL_OK")
</pallas_src>

<mosaic_0001>
module attributes {stable_mosaic.version = 11 : i64} {
  func.func @kernel(%arg0: i32, %arg1: memref<4x512xf32, #tpu.memory_space<vmem>>, %arg2: memref<16x4xf32, #tpu.memory_space<vmem>>, %arg3: memref<4x1xf32, #tpu.memory_space<vmem>>, %arg4: memref<4x72xf32, #tpu.memory_space<vmem>>, %arg5: memref<4x1xf32, #tpu.memory_space<vmem>>, %arg6: memref<3x4xf32, #tpu.memory_space<vmem>>, %arg7: memref<3x1xf32, #tpu.memory_space<vmem>>, %arg8: memref<2x3x256xf32, #tpu.memory_space<vmem>>, %arg9: memref<72x512xf32, #tpu.memory_space<vmem>>) attributes {dimension_semantics = [#tpu.dimension_semantics<parallel>], iteration_bounds = array<i64: 1>, scalar_prefetch = 0 : i64, scratch_operands = 1 : i64, tpu.core_type = #tpu.core_type<tc>, window_params = [{transform_indices = @transform_0, window_bounds = array<i64: 4, 512>}, {pipeline_mode = #tpu.pipeline_mode<synchronous>, transform_indices = @transform_1, window_bounds = array<i64: 16, 4>}, {pipeline_mode = #tpu.pipeline_mode<synchronous>, transform_indices = @transform_2, window_bounds = array<i64: 4, 1>}, {pipeline_mode = #tpu.pipeline_mode<synchronous>, transform_indices = @transform_3, window_bounds = array<i64: 4, 72>}, {pipeline_mode = #tpu.pipeline_mode<synchronous>, transform_indices = @transform_4, window_bounds = array<i64: 4, 1>}, {pipeline_mode = #tpu.pipeline_mode<synchronous>, transform_indices = @transform_5, window_bounds = array<i64: 3, 4>}, {pipeline_mode = #tpu.pipeline_mode<synchronous>, transform_indices = @transform_6, window_bounds = array<i64: 3, 1>}, {transform_indices = @transform_7, window_bounds = array<i64: 2, 3, 256>}]} {
    %0 = tpu.iota {dimensions = array<i32: 1>} : vector<1x512xi32>
    %1 = arith.sitofp %0 : vector<1x512xi32> to vector<1x512xf32>
    %cst = arith.constant 5.000000e-01 : f32
    %2 = vector.broadcast %cst : f32 to vector<1x512xf32>
    %3 = arith.addf %1, %2 : vector<1x512xf32>
    %cst_0 = arith.constant 6.250000e-02 : f32
    %4 = vector.broadcast %cst_0 : f32 to vector<1x512xf32>
    %5 = arith.mulf %3, %4 : vector<1x512xf32>
    %6 = math.floor %5 : vector<1x512xf32>
    %cst_1 = arith.constant 1.600000e+01 : f32
    %7 = vector.broadcast %cst_1 : f32 to vector<1x512xf32>
    %8 = arith.mulf %7, %6 : vector<1x512xf32>
    %9 = arith.subf %1, %8 : vector<1x512xf32>
    %cst_2 = arith.constant 5.000000e-01 : f32
    %10 = vector.broadcast %cst_2 : f32 to vector<1x512xf32>
    %11 = arith.addf %6, %10 : vector<1x512xf32>
    %cst_3 = arith.constant 6.250000e-02 : f32
    %12 = vector.broadcast %cst_3 : f32 to vector<1x512xf32>
    %13 = arith.mulf %11, %12 : vector<1x512xf32>
    %14 = math.floor %13 : vector<1x512xf32>
    %cst_4 = arith.constant 1.600000e+01 : f32
    %15 = vector.broadcast %cst_4 : f32 to vector<1x512xf32>
    %16 = arith.mulf %15, %14 : vector<1x512xf32>
    %17 = arith.subf %6, %16 : vector<1x512xf32>
    %cst_5 = arith.constant 2.000000e+00 : f32
    %18 = vector.broadcast %cst_5 : f32 to vector<1x512xf32>
    %19 = arith.subf %17, %18 : vector<1x512xf32>
    %cst_6 = arith.constant 2.000000e+00 : f32
    %20 = vector.broadcast %cst_6 : f32 to vector<1x512xf32>
    %21 = arith.subf %9, %20 : vector<1x512xf32>
    %cst_7 = arith.constant 0.000000e+00 : f32
    %22 = vector.broadcast %cst_7 : f32 to vector<1x512xf32>
    %23 = arith.cmpf oge, %19, %22 : vector<1x512xf32>
    %cst_8 = arith.constant 0.000000e+00 : f32
    %24 = vector.broadcast %cst_8 : f32 to vector<1x512xf32>
    %25 = arith.cmpf oge, %21, %24 : vector<1x512xf32>
    %26 = arith.andi %23, %25 : vector<1x512xi1>
    %cst_9 = arith.constant 1.000000e+00 : f32
    %cst_10 = arith.constant 0.000000e+00 : f32
    %27 = vector.broadcast %cst_9 : f32 to vector<1x512xf32>
    %28 = vector.broadcast %cst_10 : f32 to vector<1x512xf32>
    %29 = arith.select %26, %27, %28 : vector<1x512xi1>, vector<1x512xf32>
    %cst_11 = arith.constant 5.000000e-01 : f32
    %30 = vector.broadcast %cst_11 : f32 to vector<1x512xf32>
    %31 = arith.addf %19, %30 : vector<1x512xf32>
    %cst_12 = arith.constant 5.000000e-01 : f32
    %32 = vector.broadcast %cst_12 : f32 to vector<1x512xf32>
    %33 = arith.mulf %31, %32 : vector<1x512xf32>
    %34 = math.floor %33 : vector<1x512xf32>
    %cst_13 = arith.constant 2.000000e+00 : f32
    %35 = vector.broadcast %cst_13 : f32 to vector<1x512xf32>
    %36 = arith.mulf %35, %34 : vector<1x512xf32>
    %37 = arith.subf %19, %36 : vector<1x512xf32>
    %cst_14 = arith.constant 5.000000e-01 : f32
    %38 = vector.broadcast %cst_14 : f32 to vector<1x512xf32>
    %39 = arith.addf %21, %38 : vector<1x512xf32>
    %cst_15 = arith.constant 5.000000e-01 : f32
    %40 = vector.broadcast %cst_15 : f32 to vector<1x512xf32>
    %41 = arith.mulf %39, %40 : vector<1x512xf32>
    %42 = math.floor %41 : vector<1x512xf32>
    %cst_16 = arith.constant 2.000000e+00 : f32
    %43 = vector.broadcast %cst_16 : f32 to vector<1x512xf32>
    %44 = arith.mulf %43, %42 : vector<1x512xf32>
    %45 = arith.subf %21, %44 : vector<1x512xf32>
    %c0 = arith.constant 0 : index
    %c0_17 = arith.constant 0 : index
    %46 = vector.load %arg2[%c0, %c0_17] : memref<16x4xf32, #tpu.memory_space<vmem>>, vector<16x4xf32>
    %c0_18 = arith.constant 0 : index
    %c0_19 = arith.constant 0 : index
    %47 = vector.load %arg1[%c0_18, %c0_19] : memref<4x512xf32, #tpu.memory_space<vmem>>, vector<4x512xf32>
    %cst_20 = arith.constant dense<0.000000e+00> : vector<16x512xf32>
    %48 = tpu.matmul %46, %47, %cst_20 {dimension_numbers = #tpu.dot_dimension_numbers<[1], [0], [0], [1], [0, 0, 1, 1], [], []>} : vector<16x4xf32>, vector<4x512xf32>, vector<16x512xf32> -> vector<16x512xf32>
    %c0_21 = arith.constant 0 : index
    %c0_22 = arith.constant 0 : index
    %49 = vector.load %arg3[%c0_21, %c0_22] : memref<4x1xf32, #tpu.memory_space<vmem>>, vector<4x1xf32>
    %50 = vector.broadcast %49 : vector<4x1xf32> to vector<4x512xf32>
    %51 = vector.broadcast %29 : vector<1x512xf32> to vector<4x512xf32>
    %52 = arith.mulf %50, %51 : vector<4x512xf32>
    %cst_23 = arith.constant 0.000000e+00 : f32
    %53 = vector.broadcast %cst_23 : f32 to vector<1x512xf32>
    %54 = arith.cmpf oeq, %37, %53 : vector<1x512xf32>
    %cst_24 = arith.constant 0.000000e+00 : f32
    %55 = vector.broadcast %cst_24 : f32 to vector<1x512xf32>
    %56 = arith.cmpf oeq, %45, %55 : vector<1x512xf32>
    %57 = arith.andi %54, %56 : vector<1x512xi1>
    %cst_25 = arith.constant 1.000000e+00 : f32
    %cst_26 = arith.constant 0.000000e+00 : f32
    %58 = vector.broadcast %cst_25 : f32 to vector<1x512xf32>
    %59 = vector.broadcast %cst_26 : f32 to vector<1x512xf32>
    %60 = arith.select %57, %58, %59 : vector<1x512xi1>, vector<1x512xf32>
    %61 = arith.mulf %29, %60 : vector<1x512xf32>
    %62 = vector.extract_strided_slice %48 {offsets = [0, 0], sizes = [4, 512], strides = [1, 1]} : vector<16x512xf32> to vector<4x512xf32>
    %63 = vector.broadcast %61 : vector<1x512xf32> to vector<4x512xf32>
    %64 = arith.mulf %63, %62 : vector<4x512xf32>
    %65 = arith.addf %52, %64 : vector<4x512xf32>
    %cst_27 = arith.constant 0.000000e+00 : f32
    %66 = vector.broadcast %cst_27 : f32 to vector<1x512xf32>
    %67 = arith.cmpf oeq, %37, %66 : vector<1x512xf32>
    %cst_28 = arith.constant 1.000000e+00 : f32
    %68 = vector.broadcast %cst_28 : f32 to vector<1x512xf32>
    %69 = arith.cmpf oeq, %45, %68 : vector<1x512xf32>
    %70 = arith.andi %67, %69 : vector<1x512xi1>
    %cst_29 = arith.constant 1.000000e+00 : f32
    %cst_30 = arith.constant 0.000000e+00 : f32
    %71 = vector.broadcast %cst_29 : f32 to vector<1x512xf32>
    %72 = vector.broadcast %cst_30 : f32 to vector<1x512xf32>
    %73 = arith.select %70, %71, %72 : vector<1x512xi1>, vector<1x512xf32>
    %74 = arith.mulf %29, %73 : vector<1x512xf32>
    %75 = vector.extract_strided_slice %48 {offsets = [4, 0], sizes = [4, 512], strides = [1, 1]} : vector<16x512xf32> to vector<4x512xf32>
    %76 = vector.broadcast %74 : vector<1x512xf32> to vector<4x512xf32>
    %77 = arith.mulf %76, %75 : vector<4x512xf32>
    %78 = arith.addf %65, %77 : vector<4x512xf32>
    %cst_31 = arith.constant 1.000000e+00 : f32
    %79 = vector.broadcast %cst_31 : f32 to vector<1x512xf32>
    %80 = arith.cmpf oeq, %37, %79 : vector<1x512xf32>
    %cst_32 = arith.constant 0.000000e+00 : f32
    %81 = vector.broadcast %cst_32 : f32 to vector<1x512xf32>
    %82 = arith.cmpf oeq, %45, %81 : vector<1x512xf32>
    %83 = arith.andi %80, %82 : vector<1x512xi1>
    %cst_33 = arith.constant 1.000000e+00 : f32
    %cst_34 = arith.constant 0.000000e+00 : f32
    %84 = vector.broadcast %cst_33 : f32 to vector<1x512xf32>
    %85 = vector.broadcast %cst_34 : f32 to vector<1x512xf32>
    %86 = arith.select %83, %84, %85 : vector<1x512xi1>, vector<1x512xf32>
    %87 = arith.mulf %29, %86 : vector<1x512xf32>
    %88 = vector.extract_strided_slice %48 {offsets = [8, 0], sizes = [4, 512], strides = [1, 1]} : vector<16x512xf32> to vector<4x512xf32>
    %89 = vector.broadcast %87 : vector<1x512xf32> to vector<4x512xf32>
    %90 = arith.mulf %89, %88 : vector<4x512xf32>
    %91 = arith.addf %78, %90 : vector<4x512xf32>
    %cst_35 = arith.constant 1.000000e+00 : f32
    %92 = vector.broadcast %cst_35 : f32 to vector<1x512xf32>
    %93 = arith.cmpf oeq, %37, %92 : vector<1x512xf32>
    %cst_36 = arith.constant 1.000000e+00 : f32
    %94 = vector.broadcast %cst_36 : f32 to vector<1x512xf32>
    %95 = arith.cmpf oeq, %45, %94 : vector<1x512xf32>
    %96 = arith.andi %93, %95 : vector<1x512xi1>
    %cst_37 = arith.constant 1.000000e+00 : f32
    %cst_38 = arith.constant 0.000000e+00 : f32
    %97 = vector.broadcast %cst_37 : f32 to vector<1x512xf32>
    %98 = vector.broadcast %cst_38 : f32 to vector<1x512xf32>
    %99 = arith.select %96, %97, %98 : vector<1x512xi1>, vector<1x512xf32>
    %100 = arith.mulf %29, %99 : vector<1x512xf32>
    %101 = vector.extract_strided_slice %48 {offsets = [12, 0], sizes = [4, 512], strides = [1, 1]} : vector<16x512xf32> to vector<4x512xf32>
    %102 = vector.broadcast %100 : vector<1x512xf32> to vector<4x512xf32>
    %103 = arith.mulf %102, %101 : vector<4x512xf32>
    %104 = arith.addf %91, %103 : vector<4x512xf32>
    %cst_39 = arith.constant 0.000000e+00 : f32
    %105 = vector.broadcast %cst_39 : f32 to vector<72x512xf32>
    %c0_40 = arith.constant 0 : index
    %c0_41 = arith.constant 0 : index
    %106 = vector.load %arg9[%c0_40, %c0_41] : memref<72x512xf32, #tpu.memory_space<vmem>>, vector<72x512xf32>
    tpu.vector_store %arg9[%c0_40, %c0_41], %105 {strides = array<i32>} : memref<72x512xf32, #tpu.memory_space<vmem>>, vector<72x512xf32>,
    %c17_i32 = arith.constant 17 : i32
    %107 = tpu.dynamic_rotate %104 by %c17_i32 dim 1 : vector<4x512xf32>, i32 -> vector<4x512xf32>
    %cst_42 = arith.constant -1.000000e+00 : f32
    %108 = vector.broadcast %cst_42 : f32 to vector<1x512xf32>
    %109 = arith.addf %17, %108 : vector<1x512xf32>
    %cst_43 = arith.constant 0.000000e+00 : f32
    %110 = vector.broadcast %cst_43 : f32 to vector<1x512xf32>
    %111 = arith.cmpf oge, %109, %110 : vector<1x512xf32>
    %cst_44 = arith.constant -1.000000e+00 : f32
    %112 = vector.broadcast %cst_44 : f32 to vector<1x512xf32>
    %113 = arith.addf %17, %112 : vector<1x512xf32>
    %cst_45 = arith.constant 1.600000e+01 : f32
    %114 = vector.broadcast %cst_45 : f32 to vector<1x512xf32>
    %115 = arith.cmpf olt, %113, %114 : vector<1x512xf32>
    %116 = arith.andi %111, %115 : vector<1x512xi1>
    %cst_46 = arith.constant -1.000000e+00 : f32
    %117 = vector.broadcast %cst_46 : f32 to vector<1x512xf32>
    %118 = arith.addf %9, %117 : vector<1x512xf32>
    %cst_47 = arith.constant 0.000000e+00 : f32
    %119 = vector.broadcast %cst_47 : f32 to vector<1x512xf32>
    %120 = arith.cmpf oge, %118, %119 : vector<1x512xf32>
    %121 = arith.andi %116, %120 : vector<1x512xi1>
    %cst_48 = arith.constant -1.000000e+00 : f32
    %122 = vector.broadcast %cst_48 : f32 to vector<1x512xf32>
    %123 = arith.addf %9, %122 : vector<1x512xf32>
    %cst_49 = arith.constant 1.600000e+01 : f32
    %124 = vector.broadcast %cst_49 : f32 to vector<1x512xf32>
    %125 = arith.cmpf olt, %123, %124 : vector<1x512xf32>
    %126 = arith.andi %121, %125 : vector<1x512xi1>
    %cst_50 = arith.constant 1.000000e+00 : f32
    %cst_51 = arith.constant 0.000000e+00 : f32
    %127 = vector.broadcast %cst_50 : f32 to vector<1x512xf32>
    %128 = vector.broadcast %cst_51 : f32 to vector<1x512xf32>
    %129 = arith.select %126, %127, %128 : vector<1x512xi1>, vector<1x512xf32>
    %130 = vector.broadcast %129 : vector<1x512xf32> to vector<4x512xf32>
    %131 = arith.mulf %107, %130 : vector<4x512xf32>
    %c0_52 = arith.constant 0 : index
    %c0_53 = arith.constant 0 : index
    %132 = vector.load %arg9[%c0_52, %c0_53] : memref<72x512xf32, #tpu.memory_space<vmem>>, vector<4x512xf32>
    tpu.vector_store %arg9[%c0_52, %c0_53], %131 {strides = array<i32>} : memref<72x512xf32, #tpu.memory_space<vmem>>, vector<4x512xf32>,
    %c16_i32 = arith.constant 16 : i32
    %133 = tpu.dynamic_rotate %104 by %c16_i32 dim 1 : vector<4x512xf32>, i32 -> vector<4x512xf32>
    %cst_54 = arith.constant -1.000000e+00 : f32
    %134 = vector.broadcast %cst_54 : f32 to vector<1x512xf32>
    %135 = arith.addf %17, %134 : vector<1x512xf32>
    %cst_55 = arith.constant 0.000000e+00 : f32
    %136 = vector.broadcast %cst_55 : f32 to vector<1x512xf32>
    %137 = arith.cmpf oge, %135, %136 : vector<1x512xf32>
    %cst_56 = arith.constant -1.000000e+00 : f32
    %138 = vector.broadcast %cst_56 : f32 to vector<1x512xf32>
    %139 = arith.addf %17, %138 : vector<1x512xf32>
    %cst_57 = arith.constant 1.600000e+01 : f32
    %140 = vector.broadcast %cst_57 : f32 to vector<1x512xf32>
    %141 = arith.cmpf olt, %139, %140 : vector<1x512xf32>
    %142 = arith.andi %137, %141 : vector<1x512xi1>
    %cst_58 = arith.constant 0.000000e+00 : f32
    %143 = vector.broadcast %cst_58 : f32 to vector<1x512xf32>
    %144 = arith.addf %9, %143 : vector<1x512xf32>
    %cst_59 = arith.constant 0.000000e+00 : f32
    %145 = vector.broadcast %cst_59 : f32 to vector<1x512xf32>
    %146 = arith.cmpf oge, %144, %145 : vector<1x512xf32>
    %147 = arith.andi %142, %146 : vector<1x512xi1>
    %cst_60 = arith.constant 0.000000e+00 : f32
    %148 = vector.broadcast %cst_60 : f32 to vector<1x512xf32>
    %149 = arith.addf %9, %148 : vector<1x512xf32>
    %cst_61 = arith.constant 1.600000e+01 : f32
    %150 = vector.broadcast %cst_61 : f32 to vector<1x512xf32>
    %151 = arith.cmpf olt, %149, %150 : vector<1x512xf32>
    %152 = arith.andi %147, %151 : vector<1x512xi1>
    %cst_62 = arith.constant 1.000000e+00 : f32
    %cst_63 = arith.constant 0.000000e+00 : f32
    %153 = vector.broadcast %cst_62 : f32 to vector<1x512xf32>
    %154 = vector.broadcast %cst_63 : f32 to vector<1x512xf32>
    %155 = arith.select %152, %153, %154 : vector<1x512xi1>, vector<1x512xf32>
    %156 = vector.broadcast %155 : vector<1x512xf32> to vector<4x512xf32>
    %157 = arith.mulf %133, %156 : vector<4x512xf32>
    %c8 = arith.constant 8 : index
    %c0_64 = arith.constant 0 : index
    %158 = vector.load %arg9[%c8, %c0_64] : memref<72x512xf32, #tpu.memory_space<vmem>>, vector<4x512xf32>
    tpu.vector_store %arg9[%c8, %c0_64], %157 {strides = array<i32>} : memref<72x512xf32, #tpu.memory_space<vmem>>, vector<4x512xf32>,
    %c15_i32 = arith.constant 15 : i32
    %159 = tpu.dynamic_rotate %104 by %c15_i32 dim 1 : vector<4x512xf32>, i32 -> vector<4x512xf32>
    %cst_65 = arith.constant -1.000000e+00 : f32
    %160 = vector.broadcast %cst_65 : f32 to vector<1x512xf32>
    %161 = arith.addf %17, %160 : vector<1x512xf32>
    %cst_66 = arith.constant 0.000000e+00 : f32
    %162 = vector.broadcast %cst_66 : f32 to vector<1x512xf32>
    %163 = arith.cmpf oge, %161, %162 : vector<1x512xf32>
    %cst_67 = arith.constant -1.000000e+00 : f32
    %164 = vector.broadcast %cst_67 : f32 to vector<1x512xf32>
    %165 = arith.addf %17, %164 : vector<1x512xf32>
    %cst_68 = arith.constant 1.600000e+01 : f32
    %166 = vector.broadcast %cst_68 : f32 to vector<1x512xf32>
    %167 = arith.cmpf olt, %165, %166 : vector<1x512xf32>
    %168 = arith.andi %163, %167 : vector<1x512xi1>
    %cst_69 = arith.constant 1.000000e+00 : f32
    %169 = vector.broadcast %cst_69 : f32 to vector<1x512xf32>
    %170 = arith.addf %9, %169 : vector<1x512xf32>
    %cst_70 = arith.constant 0.000000e+00 : f32
    %171 = vector.broadcast %cst_70 : f32 to vector<1x512xf32>
    %172 = arith.cmpf oge, %170, %171 : vector<1x512xf32>
    %173 = arith.andi %168, %172 : vector<1x512xi1>
    %cst_71 = arith.constant 1.000000e+00 : f32
    %174 = vector.broadcast %cst_71 : f32 to vector<1x512xf32>
    %175 = arith.addf %9, %174 : vector<1x512xf32>
    %cst_72 = arith.constant 1.600000e+01 : f32
    %176 = vector.broadcast %cst_72 : f32 to vector<1x512xf32>
    %177 = arith.cmpf olt, %175, %176 : vector<1x512xf32>
    %178 = arith.andi %173, %177 : vector<1x512xi1>
    %cst_73 = arith.constant 1.000000e+00 : f32
    %cst_74 = arith.constant 0.000000e+00 : f32
    %179 = vector.broadcast %cst_73 : f32 to vector<1x512xf32>
    %180 = vector.broadcast %cst_74 : f32 to vector<1x512xf32>
    %181 = arith.select %178, %179, %180 : vector<1x512xi1>, vector<1x512xf32>
    %182 = vector.broadcast %181 : vector<1x512xf32> to vector<4x512xf32>
    %183 = arith.mulf %159, %182 : vector<4x512xf32>
    %c16 = arith.constant 16 : index
    %c0_75 = arith.constant 0 : index
    %184 = vector.load %arg9[%c16, %c0_75] : memref<72x512xf32, #tpu.memory_space<vmem>>, vector<4x512xf32>
    tpu.vector_store %arg9[%c16, %c0_75], %183 {strides = array<i32>} : memref<72x512xf32, #tpu.memory_space<vmem>>, vector<4x512xf32>,
    %c1_i32 = arith.constant 1 : i32
    %185 = tpu.dynamic_rotate %104 by %c1_i32 dim 1 : vector<4x512xf32>, i32 -> vector<4x512xf32>
    %cst_76 = arith.constant 0.000000e+00 : f32
    %186 = vector.broadcast %cst_76 : f32 to vector<1x512xf32>
    %187 = arith.addf %17, %186 : vector<1x512xf32>
    %cst_77 = arith.constant 0.000000e+00 : f32
    %188 = vector.broadcast %cst_77 : f32 to vector<1x512xf32>
    %189 = arith.cmpf oge, %187, %188 : vector<1x512xf32>
    %cst_78 = arith.constant 0.000000e+00 : f32
    %190 = vector.broadcast %cst_78 : f32 to vector<1x512xf32>
    %191 = arith.addf %17, %190 : vector<1x512xf32>
    %cst_79 = arith.constant 1.600000e+01 : f32
    %192 = vector.broadcast %cst_79 : f32 to vector<1x512xf32>
    %193 = arith.cmpf olt, %191, %192 : vector<1x512xf32>
    %194 = arith.andi %189, %193 : vector<1x512xi1>
    %cst_80 = arith.constant -1.000000e+00 : f32
    %195 = vector.broadcast %cst_80 : f32 to vector<1x512xf32>
    %196 = arith.addf %9, %195 : vector<1x512xf32>
    %cst_81 = arith.constant 0.000000e+00 : f32
    %197 = vector.broadcast %cst_81 : f32 to vector<1x512xf32>
    %198 = arith.cmpf oge, %196, %197 : vector<1x512xf32>
    %199 = arith.andi %194, %198 : vector<1x512xi1>
    %cst_82 = arith.constant -1.000000e+00 : f32
    %200 = vector.broadcast %cst_82 : f32 to vector<1x512xf32>
    %201 = arith.addf %9, %200 : vector<1x512xf32>
    %cst_83 = arith.constant 1.600000e+01 : f32
    %202 = vector.broadcast %cst_83 : f32 to vector<1x512xf32>
    %203 = arith.cmpf olt, %201, %202 : vector<1x512xf32>
    %204 = arith.andi %199, %203 : vector<1x512xi1>
    %cst_84 = arith.constant 1.000000e+00 : f32
    %cst_85 = arith.constant 0.000000e+00 : f32
    %205 = vector.broadcast %cst_84 : f32 to vector<1x512xf32>
    %206 = vector.broadcast %cst_85 : f32 to vector<1x512xf32>
    %207 = arith.select %204, %205, %206 : vector<1x512xi1>, vector<1x512xf32>
    %208 = vector.broadcast %207 : vector<1x512xf32> to vector<4x512xf32>
    %209 = arith.mulf %185, %208 : vector<4x512xf32>
    %c24 = arith.constant 24 : index
    %c0_86 = arith.constant 0 : index
    %210 = vector.load %arg9[%c24, %c0_86] : memref<72x512xf32, #tpu.memory_space<vmem>>, vector<4x512xf32>
    tpu.vector_store %arg9[%c24, %c0_86], %209 {strides = array<i32>} : memref<72x512xf32, #tpu.memory_space<vmem>>, vector<4x512xf32>,
    %c32 = arith.constant 32 : index
    %c0_87 = arith.constant 0 : index
    %211 = vector.load %arg9[%c32, %c0_87] : memref<72x512xf32, #tpu.memory_space<vmem>>, vector<4x512xf32>
    tpu.vector_store %arg9[%c32, %c0_87], %104 {strides = array<i32>} : memref<72x512xf32, #tpu.memory_space<vmem>>, vector<4x512xf32>,
    %c511_i32 = arith.constant 511 : i32
    %212 = tpu.dynamic_rotate %104 by %c511_i32 dim 1 : vector<4x512xf32>, i32 -> vector<4x512xf32>
    %cst_88 = arith.constant 0.000000e+00 : f32
    %213 = vector.broadcast %cst_88 : f32 to vector<1x512xf32>
    %214 = arith.addf %17, %213 : vector<1x512xf32>
    %cst_89 = arith.constant 0.000000e+00 : f32
    %215 = vector.broadcast %cst_89 : f32 to vector<1x512xf32>
    %216 = arith.cmpf oge, %214, %215 : vector<1x512xf32>
    %cst_90 = arith.constant 0.000000e+00 : f32
    %217 = vector.broadcast %cst_90 : f32 to vector<1x512xf32>
    %218 = arith.addf %17, %217 : vector<1x512xf32>
    %cst_91 = arith.constant 1.600000e+01 : f32
    %219 = vector.broadcast %cst_91 : f32 to vector<1x512xf32>
    %220 = arith.cmpf olt, %218, %219 : vector<1x512xf32>
    %221 = arith.andi %216, %220 : vector<1x512xi1>
    %cst_92 = arith.constant 1.000000e+00 : f32
    %222 = vector.broadcast %cst_92 : f32 to vector<1x512xf32>
    %223 = arith.addf %9, %222 : vector<1x512xf32>
    %cst_93 = arith.constant 0.000000e+00 : f32
    %224 = vector.broadcast %cst_93 : f32 to vector<1x512xf32>
    %225 = arith.cmpf oge, %223, %224 : vector<1x512xf32>
    %226 = arith.andi %221, %225 : vector<1x512xi1>
    %cst_94 = arith.constant 1.000000e+00 : f32
    %227 = vector.broadcast %cst_94 : f32 to vector<1x512xf32>
    %228 = arith.addf %9, %227 : vector<1x512xf32>
    %cst_95 = arith.constant 1.600000e+01 : f32
    %229 = vector.broadcast %cst_95 : f32 to vector<1x512xf32>
    %230 = arith.cmpf olt, %228, %229 : vector<1x512xf32>
    %231 = arith.andi %226, %230 : vector<1x512xi1>
    %cst_96 = arith.constant 1.000000e+00 : f32
    %cst_97 = arith.constant 0.000000e+00 : f32
    %232 = vector.broadcast %cst_96 : f32 to vector<1x512xf32>
    %233 = vector.broadcast %cst_97 : f32 to vector<1x512xf32>
    %234 = arith.select %231, %232, %233 : vector<1x512xi1>, vector<1x512xf32>
    %235 = vector.broadcast %234 : vector<1x512xf32> to vector<4x512xf32>
    %236 = arith.mulf %212, %235 : vector<4x512xf32>
    %c40 = arith.constant 40 : index
    %c0_98 = arith.constant 0 : index
    %237 = vector.load %arg9[%c40, %c0_98] : memref<72x512xf32, #tpu.memory_space<vmem>>, vector<4x512xf32>
    tpu.vector_store %arg9[%c40, %c0_98], %236 {strides = array<i32>} : memref<72x512xf32, #tpu.memory_space<vmem>>, vector<4x512xf32>,
    %c497_i32 = arith.constant 497 : i32
    %238 = tpu.dynamic_rotate %104 by %c497_i32 dim 1 : vector<4x512xf32>, i32 -> vector<4x512xf32>
    %cst_99 = arith.constant 1.000000e+00 : f32
    %239 = vector.broadcast %cst_99 : f32 to vector<1x512xf32>
    %240 = arith.addf %17, %239 : vector<1x512xf32>
    %cst_100 = arith.constant 0.000000e+00 : f32
    %241 = vector.broadcast %cst_100 : f32 to vector<1x512xf32>
    %242 = arith.cmpf oge, %240, %241 : vector<1x512xf32>
    %cst_101 = arith.constant 1.000000e+00 : f32
    %243 = vector.broadcast %cst_101 : f32 to vector<1x512xf32>
    %244 = arith.addf %17, %243 : vector<1x512xf32>
    %cst_102 = arith.constant 1.600000e+01 : f32
    %245 = vector.broadcast %cst_102 : f32 to vector<1x512xf32>
    %246 = arith.cmpf olt, %244, %245 : vector<1x512xf32>
    %247 = arith.andi %242, %246 : vector<1x512xi1>
    %cst_103 = arith.constant -1.000000e+00 : f32
    %248 = vector.broadcast %cst_103 : f32 to vector<1x512xf32>
    %249 = arith.addf %9, %248 : vector<1x512xf32>
    %cst_104 = arith.constant 0.000000e+00 : f32
    %250 = vector.broadcast %cst_104 : f32 to vector<1x512xf32>
    %251 = arith.cmpf oge, %249, %250 : vector<1x512xf32>
    %252 = arith.andi %247, %251 : vector<1x512xi1>
    %cst_105 = arith.constant -1.000000e+00 : f32
    %253 = vector.broadcast %cst_105 : f32 to vector<1x512xf32>
    %254 = arith.addf %9, %253 : vector<1x512xf32>
    %cst_106 = arith.constant 1.600000e+01 : f32
    %255 = vector.broadcast %cst_106 : f32 to vector<1x512xf32>
    %256 = arith.cmpf olt, %254, %255 : vector<1x512xf32>
    %257 = arith.andi %252, %256 : vector<1x512xi1>
    %cst_107 = arith.constant 1.000000e+00 : f32
    %cst_108 = arith.constant 0.000000e+00 : f32
    %258 = vector.broadcast %cst_107 : f32 to vector<1x512xf32>
    %259 = vector.broadcast %cst_108 : f32 to vector<1x512xf32>
    %260 = arith.select %257, %258, %259 : vector<1x512xi1>, vector<1x512xf32>
    %261 = vector.broadcast %260 : vector<1x512xf32> to vector<4x512xf32>
    %262 = arith.mulf %238, %261 : vector<4x512xf32>
    %c48 = arith.constant 48 : index
    %c0_109 = arith.constant 0 : index
    %263 = vector.load %arg9[%c48, %c0_109] : memref<72x512xf32, #tpu.memory_space<vmem>>, vector<4x512xf32>
    tpu.vector_store %arg9[%c48, %c0_109], %262 {strides = array<i32>} : memref<72x512xf32, #tpu.memory_space<vmem>>, vector<4x512xf32>,
    %c496_i32 = arith.constant 496 : i32
    %264 = tpu.dynamic_rotate %104 by %c496_i32 dim 1 : vector<4x512xf32>, i32 -> vector<4x512xf32>
    %cst_110 = arith.constant 1.000000e+00 : f32
    %265 = vector.broadcast %cst_110 : f32 to vector<1x512xf32>
    %266 = arith.addf %17, %265 : vector<1x512xf32>
    %cst_111 = arith.constant 0.000000e+00 : f32
    %267 = vector.broadcast %cst_111 : f32 to vector<1x512xf32>
    %268 = arith.cmpf oge, %266, %267 : vector<1x512xf32>
    %cst_112 = arith.constant 1.000000e+00 : f32
    %269 = vector.broadcast %cst_112 : f32 to vector<1x512xf32>
    %270 = arith.addf %17, %269 : vector<1x512xf32>
    %cst_113 = arith.constant 1.600000e+01 : f32
    %271 = vector.broadcast %cst_113 : f32 to vector<1x512xf32>
    %272 = arith.cmpf olt, %270, %271 : vector<1x512xf32>
    %273 = arith.andi %268, %272 : vector<1x512xi1>
    %cst_114 = arith.constant 0.000000e+00 : f32
    %274 = vector.broadcast %cst_114 : f32 to vector<1x512xf32>
    %275 = arith.addf %9, %274 : vector<1x512xf32>
    %cst_115 = arith.constant 0.000000e+00 : f32
    %276 = vector.broadcast %cst_115 : f32 to vector<1x512xf32>
    %277 = arith.cmpf oge, %275, %276 : vector<1x512xf32>
    %278 = arith.andi %273, %277 : vector<1x512xi1>
    %cst_116 = arith.constant 0.000000e+00 : f32
    %279 = vector.broadcast %cst_116 : f32 to vector<1x512xf32>
    %280 = arith.addf %9, %279 : vector<1x512xf32>
    %cst_117 = arith.constant 1.600000e+01 : f32
    %281 = vector.broadcast %cst_117 : f32 to vector<1x512xf32>
    %282 = arith.cmpf olt, %280, %281 : vector<1x512xf32>
    %283 = arith.andi %278, %282 : vector<1x512xi1>
    %cst_118 = arith.constant 1.000000e+00 : f32
    %cst_119 = arith.constant 0.000000e+00 : f32
    %284 = vector.broadcast %cst_118 : f32 to vector<1x512xf32>
    %285 = vector.broadcast %cst_119 : f32 to vector<1x512xf32>
    %286 = arith.select %283, %284, %285 : vector<1x512xi1>, vector<1x512xf32>
    %287 = vector.broadcast %286 : vector<1x512xf32> to vector<4x512xf32>
    %288 = arith.mulf %264, %287 : vector<4x512xf32>
    %c56 = arith.constant 56 : index
    %c0_120 = arith.constant 0 : index
    %289 = vector.load %arg9[%c56, %c0_120] : memref<72x512xf32, #tpu.memory_space<vmem>>, vector<4x512xf32>
    tpu.vector_store %arg9[%c56, %c0_120], %288 {strides = array<i32>} : memref<72x512xf32, #tpu.memory_space<vmem>>, vector<4x512xf32>,
    %c495_i32 = arith.constant 495 : i32
    %290 = tpu.dynamic_rotate %104 by %c495_i32 dim 1 : vector<4x512xf32>, i32 -> vector<4x512xf32>
    %cst_121 = arith.constant 1.000000e+00 : f32
    %291 = vector.broadcast %cst_121 : f32 to vector<1x512xf32>
    %292 = arith.addf %17, %291 : vector<1x512xf32>
    %cst_122 = arith.constant 0.000000e+00 : f32
    %293 = vector.broadcast %cst_122 : f32 to vector<1x512xf32>
    %294 = arith.cmpf oge, %292, %293 : vector<1x512xf32>
    %cst_123 = arith.constant 1.000000e+00 : f32
    %295 = vector.broadcast %cst_123 : f32 to vector<1x512xf32>
    %296 = arith.addf %17, %295 : vector<1x512xf32>
    %cst_124 = arith.constant 1.600000e+01 : f32
    %297 = vector.broadcast %cst_124 : f32 to vector<1x512xf32>
    %298 = arith.cmpf olt, %296, %297 : vector<1x512xf32>
    %299 = arith.andi %294, %298 : vector<1x512xi1>
    %cst_125 = arith.constant 1.000000e+00 : f32
    %300 = vector.broadcast %cst_125 : f32 to vector<1x512xf32>
    %301 = arith.addf %9, %300 : vector<1x512xf32>
    %cst_126 = arith.constant 0.000000e+00 : f32
    %302 = vector.broadcast %cst_126 : f32 to vector<1x512xf32>
    %303 = arith.cmpf oge, %301, %302 : vector<1x512xf32>
    %304 = arith.andi %299, %303 : vector<1x512xi1>
    %cst_127 = arith.constant 1.000000e+00 : f32
    %305 = vector.broadcast %cst_127 : f32 to vector<1x512xf32>
    %306 = arith.addf %9, %305 : vector<1x512xf32>
    %cst_128 = arith.constant 1.600000e+01 : f32
    %307 = vector.broadcast %cst_128 : f32 to vector<1x512xf32>
    %308 = arith.cmpf olt, %306, %307 : vector<1x512xf32>
    %309 = arith.andi %304, %308 : vector<1x512xi1>
    %cst_129 = arith.constant 1.000000e+00 : f32
    %cst_130 = arith.constant 0.000000e+00 : f32
    %310 = vector.broadcast %cst_129 : f32 to vector<1x512xf32>
    %311 = vector.broadcast %cst_130 : f32 to vector<1x512xf32>
    %312 = arith.select %309, %310, %311 : vector<1x512xi1>, vector<1x512xf32>
    %313 = vector.broadcast %312 : vector<1x512xf32> to vector<4x512xf32>
    %314 = arith.mulf %290, %313 : vector<4x512xf32>
    %c64 = arith.constant 64 : index
    %c0_131 = arith.constant 0 : index
    %315 = vector.load %arg9[%c64, %c0_131] : memref<72x512xf32, #tpu.memory_space<vmem>>, vector<4x512xf32>
    tpu.vector_store %arg9[%c64, %c0_131], %314 {strides = array<i32>} : memref<72x512xf32, #tpu.memory_space<vmem>>, vector<4x512xf32>,
    %c0_132 = arith.constant 0 : index
    %c0_133 = arith.constant 0 : index
    %316 = vector.load %arg4[%c0_132, %c0_133] : memref<4x72xf32, #tpu.memory_space<vmem>>, vector<4x72xf32>
    %c0_134 = arith.constant 0 : index
    %c0_135 = arith.constant 0 : index
    %317 = vector.load %arg9[%c0_134, %c0_135] : memref<72x512xf32, #tpu.memory_space<vmem>>, vector<72x512xf32>
    %cst_136 = arith.constant dense<0.000000e+00> : vector<4x512xf32>
    %318 = tpu.matmul %316, %317, %cst_136 {dimension_numbers = #tpu.dot_dimension_numbers<[1], [0], [0], [1], [0, 0, 1, 1], [], []>} : vector<4x72xf32>, vector<72x512xf32>, vector<4x512xf32> -> vector<4x512xf32>
    %c0_137 = arith.constant 0 : index
    %c0_138 = arith.constant 0 : index
    %319 = vector.load %arg5[%c0_137, %c0_138] : memref<4x1xf32, #tpu.memory_space<vmem>>, vector<4x1xf32>
    %320 = vector.broadcast %319 : vector<4x1xf32> to vector<4x512xf32>
    %321 = arith.addf %318, %320 : vector<4x512xf32>
    %cst_139 = arith.constant 0.000000e+00 : f32
    %322 = vector.broadcast %cst_139 : f32 to vector<4x512xf32>
    %323 = arith.maximumf %321, %322 : vector<4x512xf32>
    %c0_140 = arith.constant 0 : index
    %c0_141 = arith.constant 0 : index
    %324 = vector.load %arg6[%c0_140, %c0_141] : memref<3x4xf32, #tpu.memory_space<vmem>>, vector<3x4xf32>
    %cst_142 = arith.constant dense<0.000000e+00> : vector<3x512xf32>
    %325 = tpu.matmul %324, %323, %cst_142 {dimension_numbers = #tpu.dot_dimension_numbers<[1], [0], [0], [1], [0, 0, 1, 1], [], []>} : vector<3x4xf32>, vector<4x512xf32>, vector<3x512xf32> -> vector<3x512xf32>
    %c0_143 = arith.constant 0 : index
    %c0_144 = arith.constant 0 : index
    %326 = vector.load %arg7[%c0_143, %c0_144] : memref<3x1xf32, #tpu.memory_space<vmem>>, vector<3x1xf32>
    %327 = vector.broadcast %326 : vector<3x1xf32> to vector<3x512xf32>
    %328 = arith.addf %325, %327 : vector<3x512xf32>
    %329 = vector.extract_strided_slice %328 {offsets = [0, 0], sizes = [3, 256], strides = [1, 1]} : vector<3x512xf32> to vector<3x256xf32>
    %c0_145 = arith.constant 0 : index
    %c0_146 = arith.constant 0 : index
    %c0_147 = arith.constant 0 : index
    %330 = vector.load %arg8[%c0_145, %c0_146, %c0_147] : memref<2x3x256xf32, #tpu.memory_space<vmem>>, vector<1x3x256xf32>
    %331 = vector.shape_cast %330 : vector<1x3x256xf32> to vector<3x256xf32>
    %332 = vector.shape_cast %329 : vector<3x256xf32> to vector<1x3x256xf32>
    tpu.vector_store %arg8[%c0_145, %c0_146, %c0_147], %332 {strides = array<i32>} : memref<2x3x256xf32, #tpu.memory_space<vmem>>, vector<1x3x256xf32>,
    %333 = vector.extract_strided_slice %328 {offsets = [0, 256], sizes = [3, 256], strides = [1, 1]} : vector<3x512xf32> to vector<3x256xf32>
    %c1 = arith.constant 1 : index
    %c0_148 = arith.constant 0 : index
    %c0_149 = arith.constant 0 : index
    %334 = vector.load %arg8[%c1, %c0_148, %c0_149] : memref<2x3x256xf32, #tpu.memory_space<vmem>>, vector<1x3x256xf32>
    %335 = vector.shape_cast %334 : vector<1x3x256xf32> to vector<3x256xf32>
    %336 = vector.shape_cast %333 : vector<3x256xf32> to vector<1x3x256xf32>
    tpu.vector_store %arg8[%c1, %c0_148, %c0_149], %336 {strides = array<i32>} : memref<2x3x256xf32, #tpu.memory_space<vmem>>, vector<1x3x256xf32>,
    return
  }
  func.func @transform_0(%arg0: i32) -> (i32, i32) {
    %c0_i32 = arith.constant 0 : i32
    %c0_i32_0 = arith.constant 0 : i32
    return %c0_i32, %arg0 : i32, i32
  }
  func.func @transform_1(%arg0: i32) -> (i32, i32) {
    %c0_i32 = arith.constant 0 : i32
    %c0_i32_0 = arith.constant 0 : i32
    %c0_i32_1 = arith.constant 0 : i32
    return %c0_i32, %c0_i32_0 : i32, i32
  }
  func.func @transform_2(%arg0: i32) -> (i32, i32) {
    %c0_i32 = arith.constant 0 : i32
    %c0_i32_0 = arith.constant 0 : i32
    %c0_i32_1 = arith.constant 0 : i32
    return %c0_i32, %c0_i32_0 : i32, i32
  }
  func.func @transform_3(%arg0: i32) -> (i32, i32) {
    %c0_i32 = arith.constant 0 : i32
    %c0_i32_0 = arith.constant 0 : i32
    %c0_i32_1 = arith.constant 0 : i32
    return %c0_i32, %c0_i32_0 : i32, i32
  }
  func.func @transform_4(%arg0: i32) -> (i32, i32) {
    %c0_i32 = arith.constant 0 : i32
    %c0_i32_0 = arith.constant 0 : i32
    %c0_i32_1 = arith.constant 0 : i32
    return %c0_i32, %c0_i32_0 : i32, i32
  }
  func.func @transform_5(%arg0: i32) -> (i32, i32) {
    %c0_i32 = arith.constant 0 : i32
    %c0_i32_0 = arith.constant 0 : i32
    %c0_i32_1 = arith.constant 0 : i32
    return %c0_i32, %c0_i32_0 : i32, i32
  }
  func.func @transform_6(%arg0: i32) -> (i32, i32) {
    %c0_i32 = arith.constant 0 : i32
    %c0_i32_0 = arith.constant 0 : i32
    %c0_i32_1 = arith.constant 0 : i32
    return %c0_i32, %c0_i32_0 : i32, i32
  }
  func.func @transform_7(%arg0: i32) -> (i32, i32, i32) {
    %c0_i32 = arith.constant 0 : i32
    %c0_i32_0 = arith.constant 0 : i32
    %c0_i32_1 = arith.constant 0 : i32
    return %arg0, %c0_i32, %c0_i32_0 : i32, i32, i32
  }
}

</mosaic_0001>

<llo_original>
// kernel: tpu_custom_call.1
$region0: #{tpu_custom_call.1}
  #allocation0 [shape = 'u32[]', space=smem, size = 0x4, offset = 0x4, fixed_abs, tag = 'smem constant byte address 0x4 - core index']
  #allocation1 [shape = 'u32[144,128]{1,0:T(1,128)}', space=vmem, size = 0x12000, scoped, tag = 'internal scratch']
  #allocation2 [shape = 'f32[72,512]{1,0:T(8,128)}', space=vmem, size = 0x24000, scoped, tag = 'scratch operand']
  %s0 = inlined_call_operand.vmem [shape: f32[4,512], index: 0, kind: input, shape index: {}]
  %s1 = inlined_call_operand.vmem [shape: f32[16,4], index: 1, kind: input, shape index: {}]
  %s2 = inlined_call_operand.vmem [shape: f32[4,1], index: 2, kind: input, shape index: {}]
  %s3 = inlined_call_operand.vmem [shape: f32[4,72], index: 3, kind: input, shape index: {}]
  %s4 = inlined_call_operand.vmem [shape: f32[4,1], index: 4, kind: input, shape index: {}]
  %s5 = inlined_call_operand.vmem [shape: f32[3,4], index: 5, kind: input, shape index: {}]
  %s6 = inlined_call_operand.vmem [shape: f32[3,1], index: 6, kind: input, shape index: {}]
  %s7 = inlined_call_operand.vmem [shape: f32[2,3,256], index: 7, kind: output, shape index: {}]
  %s8 = sld [smem:[#allocation0]]
  $region38: #{tpu_custom_call.1} parent=0
    _
  %s10 = ssub.s32 1, %s8
  %s11 = scalar_select 0, %s10, %s8
  // Predicated region
  $region2: #{tpu_custom_call.1} parent=0 // pred_check
    _
  $region3: #{tpu_custom_call.1} parent=0 // pred_check_branch
    %13 = sbr.rel (0) target = $region5
  $region4: #{tpu_custom_call.1} parent=0 // pred_region
    _
  $region5: #{tpu_custom_call.1} parent=0 // pred_fallthru
    _
  // Predicated region
  $region6: #{tpu_custom_call.1} parent=0 // pred_check
    _
  $region7: #{tpu_custom_call.1} parent=0 // pred_check_branch
    %15 = sbr.rel (0) target = $region9
  $region8: #{tpu_custom_call.1} parent=0 // pred_region
    _
  $region9: #{tpu_custom_call.1} parent=0 // pred_fallthru
    _
  // Predicated region
  $region10: #{tpu_custom_call.1} parent=0 // pred_check
    _
  $region11: #{tpu_custom_call.1} parent=0 // pred_check_branch
    %17 = sbr.rel (0) target = $region13
  $region12: #{tpu_custom_call.1} parent=0 // pred_region
    _
  $region13: #{tpu_custom_call.1} parent=0 // pred_fallthru
    _
  // Predicated region
  $region14: #{tpu_custom_call.1} parent=0 // pred_check
    _
  $region15: #{tpu_custom_call.1} parent=0 // pred_check_branch
    %19 = sbr.rel (0) target = $region17
  $region16: #{tpu_custom_call.1} parent=0 // pred_region
    _
  $region17: #{tpu_custom_call.1} parent=0 // pred_fallthru
    _
  // Predicated region
  $region18: #{tpu_custom_call.1} parent=0 // pred_check
    _
  $region19: #{tpu_custom_call.1} parent=0 // pred_check_branch
    %21 = sbr.rel (0) target = $region21
  $region20: #{tpu_custom_call.1} parent=0 // pred_region
    _
  $region21: #{tpu_custom_call.1} parent=0 // pred_fallthru
    _
  // Predicated region
  $region22: #{tpu_custom_call.1} parent=0 // pred_check
    _
  $region23: #{tpu_custom_call.1} parent=0 // pred_check_branch
    %23 = sbr.rel (0) target = $region25
  $region24: #{tpu_custom_call.1} parent=0 // pred_region
    _
  $region25: #{tpu_custom_call.1} parent=0 // pred_fallthru
    _
  // Predicated region
  $region26: #{tpu_custom_call.1} parent=0 // pred_check
    _
  $region27: #{tpu_custom_call.1} parent=0 // pred_check_branch
    %25 = sbr.rel (0) target = $region29
  $region28: #{tpu_custom_call.1} parent=0 // pred_region
    _
  $region29: #{tpu_custom_call.1} parent=0 // pred_fallthru
    _
  %v26 = vlaneseq
  %v27 = vand.u32 %v26, 127
  %v28 = vadd.s32 %v27, 128
  %v29 = vadd.s32 %v27, 256
  %v30 = vadd.s32 %v27, 384
  %v31 = vcvt.s32.f32 %v27
  %v32 = vcvt.s32.f32 %v28
  %v33 = vcvt.s32.f32 %v29
  %v34 = vcvt.s32.f32 %v30
  %v35 = vadd.f32 %v31, 0.5
  %v36 = vadd.f32 %v32, 0.5
  %v37 = vadd.f32 %v33, 0.5
  %v38 = vadd.f32 %v34, 0.5
  %v39 = vmul.f32 %v35, 0.0625
  %v40 = vmul.f32 %v36, 0.0625
  %v41 = vmul.f32 %v37, 0.0625
  %v42 = vmul.f32 %v38, 0.0625
  %v43 = vfloor.f32 %v39
  %v44 = vfloor.f32 %v40
  %v45 = vfloor.f32 %v41
  %v46 = vfloor.f32 %v42
  %v47 = vmul.f32 %v43, 16.0
  %v48 = vmul.f32 %v44, 16.0
  %v49 = vmul.f32 %v45, 16.0
  %v50 = vmul.f32 %v46, 16.0
  %v51 = vsub.f32 %v31, %v47
  %v52 = vsub.f32 %v32, %v48
  %v53 = vsub.f32 %v33, %v49
  %v54 = vsub.f32 %v34, %v50
  %v55 = vadd.f32 %v43, 0.5
  %v56 = vadd.f32 %v44, 0.5
  %v57 = vadd.f32 %v45, 0.5
  %v58 = vadd.f32 %v46, 0.5
  %v59 = vmul.f32 %v55, 0.0625
  %v60 = vmul.f32 %v56, 0.0625
  %v61 = vmul.f32 %v57, 0.0625
  %v62 = vmul.f32 %v58, 0.0625
  %v63 = vfloor.f32 %v59
  %v64 = vfloor.f32 %v60
  %v65 = vfloor.f32 %v61
  %v66 = vfloor.f32 %v62
  %v67 = vmul.f32 %v63, 16.0
  %v68 = vmul.f32 %v64, 16.0
  %v69 = vmul.f32 %v65, 16.0
  %v70 = vmul.f32 %v66, 16.0
  %v71 = vsub.f32 %v43, %v67
  %v72 = vsub.f32 %v44, %v68
  %v73 = vsub.f32 %v45, %v69
  %v74 = vsub.f32 %v46, %v70
  %v75 = vsub.f32 %v71, 2.0
  %v76 = vsub.f32 %v72, 2.0
  %v77 = vsub.f32 %v73, 2.0
  %v78 = vsub.f32 %v74, 2.0
  %v79 = vsub.f32 %v51, 2.0
  %v80 = vsub.f32 %v52, 2.0
  %v81 = vsub.f32 %v53, 2.0
  %v82 = vsub.f32 %v54, 2.0
  %vm83 = vcmp.ge.f32.partialorder %v75, 0.0
  %vm84 = vcmp.ge.f32.partialorder %v76, 0.0
  %vm85 = vcmp.ge.f32.partialorder %v77, 0.0
  %vm86 = vcmp.ge.f32.partialorder %v78, 0.0
  %vm87 = vcmp.ge.f32.partialorder %v79, 0.0
  %vm88 = vcmp.ge.f32.partialorder %v80, 0.0
  %vm89 = vcmp.ge.f32.partialorder %v81, 0.0
  %vm90 = vcmp.ge.f32.partialorder %v82, 0.0
  %vm91 = vmand %vm83, %vm87
  %vm92 = vmand %vm84, %vm88
  %vm93 = vmand %vm85, %vm89
  %vm94 = vmand %vm86, %vm90
  %v95 = vsel %vm91, 1.0, 0.0
  %v96 = vsel %vm92, 1.0, 0.0
  %v97 = vsel %vm93, 1.0, 0.0
  %v98 = vsel %vm94, 1.0, 0.0
  %v99 = vadd.f32 %v75, 0.5
  %v100 = vadd.f32 %v76, 0.5
  %v101 = vadd.f32 %v77, 0.5
  %v102 = vadd.f32 %v78, 0.5
  %v103 = vmul.f32 %v99, 0.5
  %v104 = vmul.f32 %v100, 0.5
  %v105 = vmul.f32 %v101, 0.5
  %v106 = vmul.f32 %v102, 0.5
  %v107 = vfloor.f32 %v103
  %v108 = vfloor.f32 %v104
  %v109 = vfloor.f32 %v105
  %v110 = vfloor.f32 %v106
  %v111 = vmul.f32 %v107, 2.0
  %v112 = vmul.f32 %v108, 2.0
  %v113 = vmul.f32 %v109, 2.0
  %v114 = vmul.f32 %v110, 2.0
  %v115 = vsub.f32 %v75, %v111
  %v116 = vsub.f32 %v76, %v112
  %v117 = vsub.f32 %v77, %v113
  %v118 = vsub.f32 %v78, %v114
  %v119 = vadd.f32 %v79, 0.5
  %v120 = vadd.f32 %v80, 0.5
  %v121 = vadd.f32 %v81, 0.5
  %v122 = vadd.f32 %v82, 0.5
  %v123 = vmul.f32 %v119, 0.5
  %v124 = vmul.f32 %v120, 0.5
  %v125 = vmul.f32 %v121, 0.5
  %v126 = vmul.f32 %v122, 0.5
  %v127 = vfloor.f32 %v123
  %v128 = vfloor.f32 %v124
  %v129 = vfloor.f32 %v125
  %v130 = vfloor.f32 %v126
  %v131 = vmul.f32 %v127, 2.0
  %v132 = vmul.f32 %v128, 2.0
  %v133 = vmul.f32 %v129, 2.0
  %v134 = vmul.f32 %v130, 2.0
  %v135 = vsub.f32 %v79, %v131
  %v136 = vsub.f32 %v80, %v132
  %v137 = vsub.f32 %v81, %v133
  %v138 = vsub.f32 %v82, %v134
  %v139 = vld [vmem:[%s1] sm:$0xff]
  %v140 = vld [vmem:[%s1 + $0x8] sm:$0xff]
  %v141 = vld [vmem:[%s0] sm:$0xff]
  %v142 = vld [vmem:[%s0 + $0x8] sm:$0xff]
  %v145 = vcombine.high %v141, %v141
  %v146 = vcombine.high %v142, %v142
  %vm147 = vcmask 31744
  %v149 = vsel %vm147, %v139, 0
  %v152 = vsel %vm147, %v140, 0
  %vm154 = vcmask 1043456
  %v155 = vsel %vm154, %v141, 0
  %v157 = vsel %vm154, %v145, 0
  %v159 = vsel %vm154, %v142, 0
  %v161 = vsel %vm154, %v146, 0
  %163 = vmatprep.subr.mxu0 0.0
  %164 = vmatpush1.msra.mxu0 0.0
  %165 = vmatprep.subr.mxu0 0.0
  %166 = vmatpush1.msra.mxu0 0.0
  %167 = vmatprep.subr.mxu0 0.0
  %168 = vmatpush1.msra.mxu0 0.0
  %169 = vmatprep.subr.mxu0 0.0
  %170 = vmatpush1.msra.mxu0 0.0
  %171 = vmatprep.subr.mxu0 0.0
  %172 = vmatpush1.msra.mxu0 0.0
  %173 = vmatprep.subr.mxu0 0.0
  %174 = vmatpush1.msra.mxu0 0.0
  %175 = vmatprep.subr.mxu0 0.0
  %176 = vmatpush1.msra.mxu0 0.0
  %177 = vmatprep.subr.mxu0 0.0
  %178 = vmatpush1.msra.mxu0 0.0
  %179 = vmatprep.subr.mxu0 0.0
  %180 = vmatpush1.msra.mxu0 0.0
  %181 = vmatprep.subr.mxu0 0.0
  %182 = vmatpush1.msra.mxu0 0.0
  %183 = vmatprep.subr.mxu0 0.0
  %184 = vmatpush1.msra.mxu0 0.0
  %185 = vmatprep.subr.mxu0 0.0
  %186 = vmatpush1.msra.mxu0 0.0
  %187 = vmatprep.subr.mxu0 0.0
  %188 = vmatpush1.msra.mxu0 0.0
  %189 = vmatprep.subr.mxu0 0.0
  %190 = vmatpush1.msra.mxu0 0.0
  %191 = vmatprep.subr.mxu0 0.0
  %192 = vmatpush1.msra.mxu0 0.0
  %193 = vmatprep.subr.mxu0 %v157
  %194 = vmatpush1.msra.mxu0 %v155
  %195 = vmatprep.subr.mxu0 0.0
  %196 = vmatpush2.msra.mxu0 0.0
  %197 = vmatprep.subr.mxu0 0.0
  %198 = vmatpush2.msra.mxu0 0.0
  %199 = vmatprep.subr.mxu0 0.0
  %200 = vmatpush2.msra.mxu0 0.0
  %201 = vmatprep.subr.mxu0 0.0
  %202 = vmatpush2.msra.mxu0 0.0
  %203 = vmatprep.subr.mxu0 0.0
  %204 = vmatpush2.msra.mxu0 0.0
  %205 = vmatprep.subr.mxu0 0.0
  %206 = vmatpush2.msra.mxu0 0.0
  %207 = vmatprep.subr.mxu0 0.0
  %208 = vmatpush2.msra.mxu0 0.0
  %209 = vmatprep.subr.mxu0 0.0
  %210 = vmatpush2.msra.mxu0 0.0
  %211 = vmatprep.subr.mxu0 0.0
  %212 = vmatpush2.msra.mxu0 0.0
  %213 = vmatprep.subr.mxu0 0.0
  %214 = vmatpush2.msra.mxu0 0.0
  %215 = vmatprep.subr.mxu0 0.0
  %216 = vmatpush2.msra.mxu0 0.0
  %217 = vmatprep.subr.mxu0 0.0
  %218 = vmatpush2.msra.mxu0 0.0
  %219 = vmatprep.subr.mxu0 0.0
  %220 = vmatpush2.msra.mxu0 0.0
  %221 = vmatprep.subr.mxu0 0.0
  %222 = vmatpush2.msra.mxu0 0.0
  %223 = vmatprep.subr.mxu0 0.0
  %224 = vmatpush2.msra.mxu0 0.0
  %225 = vmatprep.subr.mxu0 0.0
  %226 = vmatpush2.msra.mxu0 0.0
  %227 = vmatprep.mubr.f32.mxu0 0.0
  %228 = vmatmul.mubr.f32.gmra.mxu0 %v149
  %v229 = vpop.f32.mrf.mxu0
  %v230 = vadd.f32 0.0, %v229
  %v231 = vpop.f32.mrf.mxu0
  %v232 = vadd.f32 0.0, %v231
  %233 = vmatprep.mubr.f32.mxu0 0.0
  %234 = vmatmul.mubr.f32.gmra.mxu0 %v152
  %v235 = vpop.f32.mrf.mxu0
  %v236 = vadd.f32 0.0, %v235
  %v237 = vpop.f32.mrf.mxu0
  %v238 = vadd.f32 0.0, %v237
  %239 = vdwg.mxu0
  %240 = vmatprep.subr.mxu0 0.0
  %241 = vmatpush1.msra.mxu0 0.0
  %242 = vmatprep.subr.mxu0 0.0
  %243 = vmatpush1.msra.mxu0 0.0
  %244 = vmatprep.subr.mxu0 0.0
  %245 = vmatpush1.msra.mxu0 0.0
  %246 = vmatprep.subr.mxu0 0.0
  %247 = vmatpush1.msra.mxu0 0.0
  %248 = vmatprep.subr.mxu0 0.0
  %249 = vmatpush1.msra.mxu0 0.0
  %250 = vmatprep.subr.mxu0 0.0
  %251 = vmatpush1.msra.mxu0 0.0
  %252 = vmatprep.subr.mxu0 0.0
  %253 = vmatpush1.msra.mxu0 0.0
  %254 = vmatprep.subr.mxu0 0.0
  %255 = vmatpush1.msra.mxu0 0.0
  %256 = vmatprep.subr.mxu0 0.0
  %257 = vmatpush1.msra.mxu0 0.0
  %258 = vmatprep.subr.mxu0 0.0
  %259 = vmatpush1.msra.mxu0 0.0
  %260 = vmatprep.subr.mxu0 0.0
  %261 = vmatpush1.msra.mxu0 0.0
  %262 = vmatprep.subr.mxu0 0.0
  %263 = vmatpush1.msra.mxu0 0.0
  %264 = vmatprep.subr.mxu0 0.0
  %265 = vmatpush1.msra.mxu0 0.0
  %266 = vmatprep.subr.mxu0 0.0
  %267 = vmatpush1.msra.mxu0 0.0
  %268 = vmatprep.subr.mxu0 0.0
  %269 = vmatpush1.msra.mxu0 0.0
  %270 = vmatprep.subr.mxu0 %v161
  %271 = vmatpush1.msra.mxu0 %v159
  %272 = vmatprep.subr.mxu0 0.0
  %273 = vmatpush2.msra.mxu0 0.0
  %274 = vmatprep.subr.mxu0 0.0
  %275 = vmatpush2.msra.mxu0 0.0
  %276 = vmatprep.subr.mxu0 0.0
  %277 = vmatpush2.msra.mxu0 0.0
  %278 = vmatprep.subr.mxu0 0.0
  %279 = vmatpush2.msra.mxu0 0.0
  %280 = vmatprep.subr.mxu0 0.0
  %281 = vmatpush2.msra.mxu0 0.0
  %282 = vmatprep.subr.mxu0 0.0
  %283 = vmatpush2.msra.mxu0 0.0
  %284 = vmatprep.subr.mxu0 0.0
  %285 = vmatpush2.msra.mxu0 0.0
  %286 = vmatprep.subr.mxu0 0.0
  %287 = vmatpush2.msra.mxu0 0.0
  %288 = vmatprep.subr.mxu0 0.0
  %289 = vmatpush2.msra.mxu0 0.0
  %290 = vmatprep.subr.mxu0 0.0
  %291 = vmatpush2.msra.mxu0 0.0
  %292 = vmatprep.subr.mxu0 0.0
  %293 = vmatpush2.msra.mxu0 0.0
  %294 = vmatprep.subr.mxu0 0.0
  %295 = vmatpush2.msra.mxu0 0.0
  %296 = vmatprep.subr.mxu0 0.0
  %297 = vmatpush2.msra.mxu0 0.0
  %298 = vmatprep.subr.mxu0 0.0
  %299 = vmatpush2.msra.mxu0 0.0
  %300 = vmatprep.subr.mxu0 0.0
  %301 = vmatpush2.msra.mxu0 0.0
  %302 = vmatprep.subr.mxu0 0.0
  %303 = vmatpush2.msra.mxu0 0.0
  %304 = vmatprep.mubr.f32.mxu0 0.0
  %305 = vmatmul.mubr.f32.gmra.mxu0 %v149
  %v306 = vpop.f32.mrf.mxu0
  %v307 = vadd.f32 0.0, %v306
  %v308 = vpop.f32.mrf.mxu0
  %v309 = vadd.f32 0.0, %v308
  %310 = vmatprep.mubr.f32.mxu0 0.0
  %311 = vmatmul.mubr.f32.gmra.mxu0 %v152
  %v312 = vpop.f32.mrf.mxu0
  %v313 = vadd.f32 0.0, %v312
  %v314 = vpop.f32.mrf.mxu0
  %v315 = vadd.f32 0.0, %v314
  %316 = vdwg.mxu0
  %v317 = vld [vmem:[%s2] sm:$0xf]
  %319 = vset.pattern.permute.xlu0 0
  %320 = vperm.xlu0 %319, %v317
  %v321 = vpop.permute.xlu0 %320
  %v323 = vmul.f32 %v321, %v95
  %v324 = vmul.f32 %v321, %v96
  %v325 = vmul.f32 %v321, %v97
  %v326 = vmul.f32 %v321, %v98
  %vm327 = vcmp.eq.f32.partialorder %v115, 0.0
  %vm328 = vcmp.eq.f32.partialorder %v116, 0.0
  %vm329 = vcmp.eq.f32.partialorder %v117, 0.0
  %vm330 = vcmp.eq.f32.partialorder %v118, 0.0
  %vm331 = vcmp.eq.f32.partialorder %v135, 0.0
  %vm332 = vcmp.eq.f32.partialorder %v136, 0.0
  %vm333 = vcmp.eq.f32.partialorder %v137, 0.0
  %vm334 = vcmp.eq.f32.partialorder %v138, 0.0
  %vm335 = vmand %vm327, %vm331
  %vm336 = vmand %vm328, %vm332
  %vm337 = vmand %vm329, %vm333
  %vm338 = vmand %vm330, %vm334
  %v339 = vsel %vm335, 1.0, 0.0
  %v340 = vsel %vm336, 1.0, 0.0
  %v341 = vsel %vm337, 1.0, 0.0
  %v342 = vsel %vm338, 1.0, 0.0
  %v343 = vmul.f32 %v95, %v339
  %v344 = vmul.f32 %v96, %v340
  %v345 = vmul.f32 %v97, %v341
  %v346 = vmul.f32 %v98, %v342
  %v347 = vmul.f32 %v343, %v230
  %v348 = vmul.f32 %v344, %v232
  %v349 = vmul.f32 %v345, %v307
  %v350 = vmul.f32 %v346, %v309
  %v351 = vadd.f32 %v323, %v347
  %v352 = vadd.f32 %v324, %v348
  %v353 = vadd.f32 %v325, %v349
  %v354 = vadd.f32 %v326, %v350
  %vm355 = vcmp.eq.f32.partialorder %v135, 1.0
  %vm356 = vcmp.eq.f32.partialorder %v136, 1.0
  %vm357 = vcmp.eq.f32.partialorder %v137, 1.0
  %vm358 = vcmp.eq.f32.partialorder %v138, 1.0
  %vm359 = vmand %vm327, %vm355
  %vm360 = vmand %vm328, %vm356
  %vm361 = vmand %vm329, %vm357
  %vm362 = vmand %vm330, %vm358
  %v363 = vsel %vm359, 1.0, 0.0
  %v364 = vsel %vm360, 1.0, 0.0
  %v365 = vsel %vm361, 1.0, 0.0
  %v366 = vsel %vm362, 1.0, 0.0
  %v367 = vmul.f32 %v95, %v363
  %v368 = vmul.f32 %v96, %v364
  %v369 = vmul.f32 %v97, %v365
  %v370 = vmul.f32 %v98, %v366
  %v371 = vmul.f32 %v367, %v230
  %v372 = vmul.f32 %v368, %v232
  %v373 = vmul.f32 %v369, %v307
  %v374 = vmul.f32 %v370, %v309
  %v379 = vrot.slane %v371, 4
  %v380 = vrot.slane %v372, 4
  %v381 = vrot.slane %v373, 4
  %v382 = vrot.slane %v374, 4
  %v387 = vadd.f32 %v351, %v379
  %v388 = vadd.f32 %v352, %v380
  %v389 = vadd.f32 %v353, %v381
  %v390 = vadd.f32 %v354, %v382
  %vm391 = vcmp.eq.f32.partialorder %v115, 1.0
  %vm392 = vcmp.eq.f32.partialorder %v116, 1.0
  %vm393 = vcmp.eq.f32.partialorder %v117, 1.0
  %vm394 = vcmp.eq.f32.partialorder %v118, 1.0
  %vm395 = vmand %vm391, %vm331
  %vm396 = vmand %vm392, %vm332
  %vm397 = vmand %vm393, %vm333
  %vm398 = vmand %vm394, %vm334
  %v399 = vsel %vm395, 1.0, 0.0
  %v400 = vsel %vm396, 1.0, 0.0
  %v401 = vsel %vm397, 1.0, 0.0
  %v402 = vsel %vm398, 1.0, 0.0
  %v403 = vmul.f32 %v95, %v399
  %v404 = vmul.f32 %v96, %v400
  %v405 = vmul.f32 %v97, %v401
  %v406 = vmul.f32 %v98, %v402
  %v407 = vmul.f32 %v403, %v236
  %v408 = vmul.f32 %v404, %v238
  %v409 = vmul.f32 %v405, %v313
  %v410 = vmul.f32 %v406, %v315
  %v411 = vadd.f32 %v387, %v407
  %v412 = vadd.f32 %v388, %v408
  %v413 = vadd.f32 %v389, %v409
  %v414 = vadd.f32 %v390, %v410
  %vm415 = vmand %vm391, %vm355
  %vm416 = vmand %vm392, %vm356
  %vm417 = vmand %vm393, %vm357
  %vm418 = vmand %vm394, %vm358
  %v419 = vsel %vm415, 1.0, 0.0
  %v420 = vsel %vm416, 1.0, 0.0
  %v421 = vsel %vm417, 1.0, 0.0
  %v422 = vsel %vm418, 1.0, 0.0
  %v423 = vmul.f32 %v95, %v419
  %v424 = vmul.f32 %v96, %v420
  %v425 = vmul.f32 %v97, %v421
  %v426 = vmul.f32 %v98, %v422
  %v427 = vmul.f32 %v423, %v236
  %v428 = vmul.f32 %v424, %v238
  %v429 = vmul.f32 %v425, %v313
  %v430 = vmul.f32 %v426, %v315
  %v435 = vrot.slane %v427, 4
  %v436 = vrot.slane %v428, 4
  %v437 = vrot.slane %v429, 4
  %v438 = vrot.slane %v430, 4
  %v443 = vadd.f32 %v411, %v435
  %v444 = vadd.f32 %v412, %v436
  %v445 = vadd.f32 %v413, %v437
  %v446 = vadd.f32 %v414, %v438
  %447 = vst [vmem:[#allocation2] sm:$0xff] 0.0
  %448 = vst [vmem:[#allocation2 + $0x8] sm:$0xff] 0.0
  %449 = vst [vmem:[#allocation2 + $0x10] sm:$0xff] 0.0
  %450 = vst [vmem:[#allocation2 + $0x18] sm:$0xff] 0.0
  %451 = vst [vmem:[#allocation2 + $0x20] sm:$0xff] 0.0
  %452 = vst [vmem:[#allocation2 + $0x28] sm:$0xff] 0.0
  %453 = vst [vmem:[#allocation2 + $0x30] sm:$0xff] 0.0
  %454 = vst [vmem:[#allocation2 + $0x38] sm:$0xff] 0.0
  %455 = vst [vmem:[#allocation2 + $0x40] sm:$0xff] 0.0
  %456 = vst [vmem:[#allocation2 + $0x48] sm:$0xff] 0.0
  %457 = vst [vmem:[#allocation2 + $0x50] sm:$0xff] 0.0
  %458 = vst [vmem:[#allocation2 + $0x58] sm:$0xff] 0.0
  %459 = vst [vmem:[#allocation2 + $0x60] sm:$0xff] 0.0
  %460 = vst [vmem:[#allocation2 + $0x68] sm:$0xff] 0.0
  %461 = vst [vmem:[#allocation2 + $0x70] sm:$0xff] 0.0
  %462 = vst [vmem:[#allocation2 + $0x78] sm:$0xff] 0.0
  %463 = vst [vmem:[#allocation2 + $0x80] sm:$0xff] 0.0
  %464 = vst [vmem:[#allocation2 + $0x88] sm:$0xff] 0.0
  %465 = vst [vmem:[#allocation2 + $0x90] sm:$0xff] 0.0
  %466 = vst [vmem:[#allocation2 + $0x98] sm:$0xff] 0.0
  %467 = vst [vmem:[#allocation2 + $0xa0] sm:$0xff] 0.0
  %468 = vst [vmem:[#allocation2 + $0xa8] sm:$0xff] 0.0
  %469 = vst [vmem:[#allocation2 + $0xb0] sm:$0xff] 0.0
  %470 = vst [vmem:[#allocation2 + $0xb8] sm:$0xff] 0.0
  %471 = vst [vmem:[#allocation2 + $0xc0] sm:$0xff] 0.0
  %472 = vst [vmem:[#allocation2 + $0xc8] sm:$0xff] 0.0
  %473 = vst [vmem:[#allocation2 + $0xd0] sm:$0xff] 0.0
  %474 = vst [vmem:[#allocation2 + $0xd8] sm:$0xff] 0.0
  %475 = vst [vmem:[#allocation2 + $0xe0] sm:$0xff] 0.0
  %476 = vst [vmem:[#allocation2 + $0xe8] sm:$0xff] 0.0
  %477 = vst [vmem:[#allocation2 + $0xf0] sm:$0xff] 0.0
  %478 = vst [vmem:[#allocation2 + $0xf8] sm:$0xff] 0.0
  %479 = vst [vmem:[#allocation2 + $0x100] sm:$0xff] 0.0
  %480 = vst [vmem:[#allocation2 + $0x108] sm:$0xff] 0.0
  %481 = vst [vmem:[#allocation2 + $0x110] sm:$0xff] 0.0
  %482 = vst [vmem:[#allocation2 + $0x118] sm:$0xff] 0.0
  %483 = vrot.lane.b32.xlu0 %v443, 17
  %v484 = vpop.permute.xlu0 %483
  %485 = vrot.lane.b32.xlu0 %v444, 17
  %v486 = vpop.permute.xlu0 %485
  %487 = vrot.lane.b32.xlu0 %v445, 17
  %v488 = vpop.permute.xlu0 %487
  %489 = vrot.lane.b32.xlu0 %v446, 17
  %v490 = vpop.permute.xlu0 %489
  %vm491 = vcmp.lt.s32.totalorder %v27, 17
  %v492 = vsel %vm491, %v488, %v490
  %v493 = vsel %vm491, %v486, %v488
  %v494 = vsel %vm491, %v484, %v486
  %v495 = vsel %vm491, %v490, %v484
  %v496 = vadd.f32 %v71, -1.0
  %v497 = vadd.f32 %v72, -1.0
  %v498 = vadd.f32 %v73, -1.0
  %v499 = vadd.f32 %v74, -1.0
  %vm500 = vcmp.ge.f32.partialorder %v496, 0.0
  %vm501 = vcmp.ge.f32.partialorder %v497, 0.0
  %vm502 = vcmp.ge.f32.partialorder %v498, 0.0
  %vm503 = vcmp.ge.f32.partialorder %v499, 0.0
  %vm504 = vcmp.lt.f32.partialorder %v496, 16.0
  %vm505 = vcmp.lt.f32.partialorder %v497, 16.0
  %vm506 = vcmp.lt.f32.partialorder %v498, 16.0
  %vm507 = vcmp.lt.f32.partialorder %v499, 16.0
  %vm508 = vmand %vm500, %vm504
  %vm509 = vmand %vm501, %vm505
  %vm510 = vmand %vm502, %vm506
  %vm511 = vmand %vm503, %vm507
  %v512 = vadd.f32 %v51, -1.0
  %v513 = vadd.f32 %v52, -1.0
  %v514 = vadd.f32 %v53, -1.0
  %v515 = vadd.f32 %v54, -1.0
  %vm516 = vcmp.ge.f32.partialorder %v512, 0.0
  %vm517 = vcmp.ge.f32.partialorder %v513, 0.0
  %vm518 = vcmp.ge.f32.partialorder %v514, 0.0
  %vm519 = vcmp.ge.f32.partialorder %v515, 0.0
  %vm520 = vmand %vm508, %vm516
  %vm521 = vmand %vm509, %vm517
  %vm522 = vmand %vm510, %vm518
  %vm523 = vmand %vm511, %vm519
  %vm524 = vcmp.lt.f32.partialorder %v512, 16.0
  %vm525 = vcmp.lt.f32.partialorder %v513, 16.0
  %vm526 = vcmp.lt.f32.partialorder %v514, 16.0
  %vm527 = vcmp.lt.f32.partialorder %v515, 16.0
  %vm528 = vmand %vm520, %vm524
  %vm529 = vmand %vm521, %vm525
  %vm530 = vmand %vm522, %vm526
  %vm531 = vmand %vm523, %vm527
  %v532 = vsel %vm528, 1.0, 0.0
  %v533 = vsel %vm529, 1.0, 0.0
  %v534 = vsel %vm530, 1.0, 0.0
  %v535 = vsel %vm531, 1.0, 0.0
  %v536 = vmul.f32 %v495, %v532
  %v537 = vmul.f32 %v494, %v533
  %v538 = vmul.f32 %v493, %v534
  %v539 = vmul.f32 %v492, %v535
  %540 = vst [vmem:[#allocation2] sm:$0xf] %v536
  %541 = vst [vmem:[#allocation2 + $0x8] sm:$0xf] %v537
  %542 = vst [vmem:[#allocation2 + $0x10] sm:$0xf] %v538
  %543 = vst [vmem:[#allocation2 + $0x18] sm:$0xf] %v539
  %544 = vrot.lane.b32.xlu0 %v443, 16
  %v545 = vpop.permute.xlu0 %544
  %546 = vrot.lane.b32.xlu0 %v444, 16
  %v547 = vpop.permute.xlu0 %546
  %548 = vrot.lane.b32.xlu0 %v445, 16
  %v549 = vpop.permute.xlu0 %548
  %550 = vrot.lane.b32.xlu0 %v446, 16
  %v551 = vpop.permute.xlu0 %550
  %vm552 = vcmp.lt.s32.totalorder %v27, 16
  %v553 = vsel %vm552, %v549, %v551
  %v554 = vsel %vm552, %v547, %v549
  %v555 = vsel %vm552, %v545, %v547
  %v556 = vsel %vm552, %v551, %v545
  %v557 = vadd.f32 %v51, 0.0
  %v558 = vadd.f32 %v52, 0.0
  %v559 = vadd.f32 %v53, 0.0
  %v560 = vadd.f32 %v54, 0.0
  %vm561 = vcmp.ge.f32.partialorder %v557, 0.0
  %vm562 = vcmp.ge.f32.partialorder %v558, 0.0
  %vm563 = vcmp.ge.f32.partialorder %v559, 0.0
  %vm564 = vcmp.ge.f32.partialorder %v560, 0.0
  %vm565 = vmand %vm508, %vm561
  %vm566 = vmand %vm509, %vm562
  %vm567 = vmand %vm510, %vm563
  %vm568 = vmand %vm511, %vm564
  %vm569 = vcmp.lt.f32.partialorder %v557, 16.0
  %vm570 = vcmp.lt.f32.partialorder %v558, 16.0
  %vm571 = vcmp.lt.f32.partialorder %v559, 16.0
  %vm572 = vcmp.lt.f32.partialorder %v560, 16.0
  %vm573 = vmand %vm565, %vm569
  %vm574 = vmand %vm566, %vm570
  %vm575 = vmand %vm567, %vm571
  %vm576 = vmand %vm568, %vm572
  %v577 = vsel %vm573, 1.0, 0.0
  %v578 = vsel %vm574, 1.0, 0.0
  %v579 = vsel %vm575, 1.0, 0.0
  %v580 = vsel %vm576, 1.0, 0.0
  %v581 = vmul.f32 %v556, %v577
  %v582 = vmul.f32 %v555, %v578
  %v583 = vmul.f32 %v554, %v579
  %v584 = vmul.f32 %v553, %v580
  %585 = vst [vmem:[#allocation2 + $0x20] sm:$0xf] %v581
  %586 = vst [vmem:[#allocation2 + $0x28] sm:$0xf] %v582
  %587 = vst [vmem:[#allocation2 + $0x30] sm:$0xf] %v583
  %588 = vst [vmem:[#allocation2 + $0x38] sm:$0xf] %v584
  %589 = vrot.lane.b32.xlu0 %v443, 15
  %v590 = vpop.permute.xlu0 %589
  %591 = vrot.lane.b32.xlu0 %v444, 15
  %v592 = vpop.permute.xlu0 %591
  %593 = vrot.lane.b32.xlu0 %v445, 15
  %v594 = vpop.permute.xlu0 %593
  %595 = vrot.lane.b32.xlu0 %v446, 15
  %v596 = vpop.permute.xlu0 %595
  %vm597 = vcmp.lt.s32.totalorder %v27, 15
  %v598 = vsel %vm597, %v594, %v596
  %v599 = vsel %vm597, %v592, %v594
  %v600 = vsel %vm597, %v590, %v592
  %v601 = vsel %vm597, %v596, %v590
  %v602 = vadd.f32 %v51, 1.0
  %v603 = vadd.f32 %v52, 1.0
  %v604 = vadd.f32 %v53, 1.0
  %v605 = vadd.f32 %v54, 1.0
  %vm606 = vcmp.ge.f32.partialorder %v602, 0.0
  %vm607 = vcmp.ge.f32.partialorder %v603, 0.0
  %vm608 = vcmp.ge.f32.partialorder %v604, 0.0
  %vm609 = vcmp.ge.f32.partialorder %v605, 0.0
  %vm610 = vmand %vm508, %vm606
  %vm611 = vmand %vm509, %vm607
  %vm612 = vmand %vm510, %vm608
  %vm613 = vmand %vm511, %vm609
  %vm614 = vcmp.lt.f32.partialorder %v602, 16.0
  %vm615 = vcmp.lt.f32.partialorder %v603, 16.0
  %vm616 = vcmp.lt.f32.partialorder %v604, 16.0
  %vm617 = vcmp.lt.f32.partialorder %v605, 16.0
  %vm618 = vmand %vm610, %vm614
  %vm619 = vmand %vm611, %vm615
  %vm620 = vmand %vm612, %vm616
  %vm621 = vmand %vm613, %vm617
  %v622 = vsel %vm618, 1.0, 0.0
  %v623 = vsel %vm619, 1.0, 0.0
  %v624 = vsel %vm620, 1.0, 0.0
  %v625 = vsel %vm621, 1.0, 0.0
  %v626 = vmul.f32 %v601, %v622
  %v627 = vmul.f32 %v600, %v623
  %v628 = vmul.f32 %v599, %v624
  %v629 = vmul.f32 %v598, %v625
  %630 = vst [vmem:[#allocation2 + $0x40] sm:$0xf] %v626
  %631 = vst [vmem:[#allocation2 + $0x48] sm:$0xf] %v627
  %632 = vst [vmem:[#allocation2 + $0x50] sm:$0xf] %v628
  %633 = vst [vmem:[#allocation2 + $0x58] sm:$0xf] %v629
  %634 = vrot.lane.b32.xlu0 %v443, 1
  %v635 = vpop.permute.xlu0 %634
  %636 = vrot.lane.b32.xlu0 %v444, 1
  %v637 = vpop.permute.xlu0 %636
  %638 = vrot.lane.b32.xlu0 %v445, 1
  %v639 = vpop.permute.xlu0 %638
  %640 = vrot.lane.b32.xlu0 %v446, 1
  %v641 = vpop.permute.xlu0 %640
  %vm642 = vcmp.lt.s32.totalorder %v27, 1
  %v643 = vsel %vm642, %v639, %v641
  %v644 = vsel %vm642, %v637, %v639
  %v645 = vsel %vm642, %v635, %v637
  %v646 = vsel %vm642, %v641, %v635
  %v647 = vadd.f32 %v71, 0.0
  %v648 = vadd.f32 %v72, 0.0
  %v649 = vadd.f32 %v73, 0.0
  %v650 = vadd.f32 %v74, 0.0
  %vm651 = vcmp.ge.f32.partialorder %v647, 0.0
  %vm652 = vcmp.ge.f32.partialorder %v648, 0.0
  %vm653 = vcmp.ge.f32.partialorder %v649, 0.0
  %vm654 = vcmp.ge.f32.partialorder %v650, 0.0
  %vm655 = vcmp.lt.f32.partialorder %v647, 16.0
  %vm656 = vcmp.lt.f32.partialorder %v648, 16.0
  %vm657 = vcmp.lt.f32.partialorder %v649, 16.0
  %vm658 = vcmp.lt.f32.partialorder %v650, 16.0
  %vm659 = vmand %vm651, %vm655
  %vm660 = vmand %vm652, %vm656
  %vm661 = vmand %vm653, %vm657
  %vm662 = vmand %vm654, %vm658
  %vm663 = vmand %vm659, %vm516
  %vm664 = vmand %vm660, %vm517
  %vm665 = vmand %vm661, %vm518
  %vm666 = vmand %vm662, %vm519
  %vm667 = vmand %vm663, %vm524
  %vm668 = vmand %vm664, %vm525
  %vm669 = vmand %vm665, %vm526
  %vm670 = vmand %vm666, %vm527
  %v671 = vsel %vm667, 1.0, 0.0
  %v672 = vsel %vm668, 1.0, 0.0
  %v673 = vsel %vm669, 1.0, 0.0
  %v674 = vsel %vm670, 1.0, 0.0
  %v675 = vmul.f32 %v646, %v671
  %v676 = vmul.f32 %v645, %v672
  %v677 = vmul.f32 %v644, %v673
  %v678 = vmul.f32 %v643, %v674
  %679 = vst [vmem:[#allocation2 + $0x60] sm:$0xf] %v675
  %680 = vst [vmem:[#allocation2 + $0x68] sm:$0xf] %v676
  %681 = vst [vmem:[#allocation2 + $0x70] sm:$0xf] %v677
  %682 = vst [vmem:[#allocation2 + $0x78] sm:$0xf] %v678
  %683 = vst [vmem:[#allocation2 + $0x80] sm:$0xf] %v443
  %684 = vst [vmem:[#allocation2 + $0x88] sm:$0xf] %v444
  %685 = vst [vmem:[#allocation2 + $0x90] sm:$0xf] %v445
  %686 = vst [vmem:[#allocation2 + $0x98] sm:$0xf] %v446
  %687 = vrot.lane.b32.xlu0 %v443, 127
  %v688 = vpop.permute.xlu0 %687
  %689 = vrot.lane.b32.xlu0 %v444, 127
  %v690 = vpop.permute.xlu0 %689
  %691 = vrot.lane.b32.xlu0 %v445, 127
  %v692 = vpop.permute.xlu0 %691
  %693 = vrot.lane.b32.xlu0 %v446, 127
  %v694 = vpop.permute.xlu0 %693
  %vm695 = vcmp.lt.s32.totalorder %v27, 127
  %v696 = vsel %vm695, %v692, %v694
  %v697 = vsel %vm695, %v690, %v692
  %v698 = vsel %vm695, %v688, %v690
  %v699 = vsel %vm695, %v694, %v688
  %vm700 = vmand %vm659, %vm606
  %vm701 = vmand %vm660, %vm607
  %vm702 = vmand %vm661, %vm608
  %vm703 = vmand %vm662, %vm609
  %vm704 = vmand %vm700, %vm614
  %vm705 = vmand %vm701, %vm615
  %vm706 = vmand %vm702, %vm616
  %vm707 = vmand %vm703, %vm617
  %v708 = vsel %vm704, 1.0, 0.0
  %v709 = vsel %vm705, 1.0, 0.0
  %v710 = vsel %vm706, 1.0, 0.0
  %v711 = vsel %vm707, 1.0, 0.0
  %v712 = vmul.f32 %v698, %v708
  %v713 = vmul.f32 %v697, %v709
  %v714 = vmul.f32 %v696, %v710
  %v715 = vmul.f32 %v699, %v711
  %716 = vst [vmem:[#allocation2 + $0xa0] sm:$0xf] %v712
  %717 = vst [vmem:[#allocation2 + $0xa8] sm:$0xf] %v713
  %718 = vst [vmem:[#allocation2 + $0xb0] sm:$0xf] %v714
  %719 = vst [vmem:[#allocation2 + $0xb8] sm:$0xf] %v715
  %720 = vrot.lane.b32.xlu0 %v443, 113
  %v721 = vpop.permute.xlu0 %720
  %722 = vrot.lane.b32.xlu0 %v444, 113
  %v723 = vpop.permute.xlu0 %722
  %724 = vrot.lane.b32.xlu0 %v445, 113
  %v725 = vpop.permute.xlu0 %724
  %726 = vrot.lane.b32.xlu0 %v446, 113
  %v727 = vpop.permute.xlu0 %726
  %vm728 = vcmp.lt.s32.totalorder %v27, 113
  %v729 = vsel %vm728, %v725, %v727
  %v730 = vsel %vm728, %v723, %v725
  %v731 = vsel %vm728, %v721, %v723
  %v732 = vsel %vm728, %v727, %v721
  %v733 = vadd.f32 %v71, 1.0
  %v734 = vadd.f32 %v72, 1.0
  %v735 = vadd.f32 %v73, 1.0
  %v736 = vadd.f32 %v74, 1.0
  %vm737 = vcmp.ge.f32.partialorder %v733, 0.0
  %vm738 = vcmp.ge.f32.partialorder %v734, 0.0
  %vm739 = vcmp.ge.f32.partialorder %v735, 0.0
  %vm740 = vcmp.ge.f32.partialorder %v736, 0.0
  %vm741 = vcmp.lt.f32.partialorder %v733, 16.0
  %vm742 = vcmp.lt.f32.partialorder %v734, 16.0
  %vm743 = vcmp.lt.f32.partialorder %v735, 16.0
  %vm744 = vcmp.lt.f32.partialorder %v736, 16.0
  %vm745 = vmand %vm737, %vm741
  %vm746 = vmand %vm738, %vm742
  %vm747 = vmand %vm739, %vm743
  %vm748 = vmand %vm740, %vm744
  %vm749 = vmand %vm745, %vm516
  %vm750 = vmand %vm746, %vm517
  %vm751 = vmand %vm747, %vm518
  %vm752 = vmand %vm748, %vm519
  %vm753 = vmand %vm749, %vm524
  %vm754 = vmand %vm750, %vm525
  %vm755 = vmand %vm751, %vm526
  %vm756 = vmand %vm752, %vm527
  %v757 = vsel %vm753, 1.0, 0.0
  %v758 = vsel %vm754, 1.0, 0.0
  %v759 = vsel %vm755, 1.0, 0.0
  %v760 = vsel %vm756, 1.0, 0.0
  %v761 = vmul.f32 %v731, %v757
  %v762 = vmul.f32 %v730, %v758
  %v763 = vmul.f32 %v729, %v759
  %v764 = vmul.f32 %v732, %v760
  %765 = vst [vmem:[#allocation2 + $0xc0] sm:$0xf] %v761
  %766 = vst [vmem:[#allocation2 + $0xc8] sm:$0xf] %v762
  %767 = vst [vmem:[#allocation2 + $0xd0] sm:$0xf] %v763
  %768 = vst [vmem:[#allocation2 + $0xd8] sm:$0xf] %v764
  %769 = vrot.lane.b32.xlu0 %v443, 112
  %v770 = vpop.permute.xlu0 %769
  %771 = vrot.lane.b32.xlu0 %v444, 112
  %v772 = vpop.permute.xlu0 %771
  %773 = vrot.lane.b32.xlu0 %v445, 112
  %v774 = vpop.permute.xlu0 %773
  %775 = vrot.lane.b32.xlu0 %v446, 112
  %v776 = vpop.permute.xlu0 %775
  %vm777 = vcmp.lt.s32.totalorder %v27, 112
  %v778 = vsel %vm777, %v774, %v776
  %v779 = vsel %vm777, %v772, %v774
  %v780 = vsel %vm777, %v770, %v772
  %v781 = vsel %vm777, %v776, %v770
  %vm782 = vmand %vm745, %vm561
  %vm783 = vmand %vm746, %vm562
  %vm784 = vmand %vm747, %vm563
  %vm785 = vmand %vm748, %vm564
  %vm786 = vmand %vm782, %vm569
  %vm787 = vmand %vm783, %vm570
  %vm788 = vmand %vm784, %vm571
  %vm789 = vmand %vm785, %vm572
  %v790 = vsel %vm786, 1.0, 0.0
  %v791 = vsel %vm787, 1.0, 0.0
  %v792 = vsel %vm788, 1.0, 0.0
  %v793 = vsel %vm789, 1.0, 0.0
  %v794 = vmul.f32 %v780, %v790
  %v795 = vmul.f32 %v779, %v791
  %v796 = vmul.f32 %v778, %v792
  %v797 = vmul.f32 %v781, %v793
  %798 = vst [vmem:[#allocation2 + $0xe0] sm:$0xf] %v794
  %799 = vst [vmem:[#allocation2 + $0xe8] sm:$0xf] %v795
  %800 = vst [vmem:[#allocation2 + $0xf0] sm:$0xf] %v796
  %801 = vst [vmem:[#allocation2 + $0xf8] sm:$0xf] %v797
  %802 = vrot.lane.b32.xlu0 %v443, 111
  %v803 = vpop.permute.xlu0 %802
  %804 = vrot.lane.b32.xlu0 %v444, 111
  %v805 = vpop.permute.xlu0 %804
  %806 = vrot.lane.b32.xlu0 %v445, 111
  %v807 = vpop.permute.xlu0 %806
  %808 = vrot.lane.b32.xlu0 %v446, 111
  %v809 = vpop.permute.xlu0 %808
  %vm810 = vcmp.lt.s32.totalorder %v27, 111
  %v811 = vsel %vm810, %v807, %v809
  %v812 = vsel %vm810, %v805, %v807
  %v813 = vsel %vm810, %v803, %v805
  %v814 = vsel %vm810, %v809, %v803
  %vm815 = vmand %vm745, %vm606
  %vm816 = vmand %vm746, %vm607
  %vm817 = vmand %vm747, %vm608
  %vm818 = vmand %vm748, %vm609
  %vm819 = vmand %vm815, %vm614
  %vm820 = vmand %vm816, %vm615
  %vm821 = vmand %vm817, %vm616
  %vm822 = vmand %vm818, %vm617
  %v823 = vsel %vm819, 1.0, 0.0
  %v824 = vsel %vm820, 1.0, 0.0
  %v825 = vsel %vm821, 1.0, 0.0
  %v826 = vsel %vm822, 1.0, 0.0
  %v827 = vmul.f32 %v813, %v823
  %v828 = vmul.f32 %v812, %v824
  %v829 = vmul.f32 %v811, %v825
  %v830 = vmul.f32 %v814, %v826
  %831 = vst [vmem:[#allocation2 + $0x100] sm:$0xf] %v827
  %832 = vst [vmem:[#allocation2 + $0x108] sm:$0xf] %v828
  %833 = vst [vmem:[#allocation2 + $0x110] sm:$0xf] %v829
  %834 = vst [vmem:[#allocation2 + $0x118] sm:$0xf] %v830
  %v835 = vld [vmem:[%s3] sm:$0xf]
  %v836 = vld [vmem:[#allocation2] sm:$0xff]
  %v837 = vld [vmem:[#allocation2 + $0x8] sm:$0xff]
  %v838 = vld [vmem:[#allocation2 + $0x10] sm:$0xff]
  %v839 = vld [vmem:[#allocation2 + $0x18] sm:$0xff]
  %v840 = vld [vmem:[#allocation2 + $0x20] sm:$0xff]
  %v841 = vld [vmem:[#allocation2 + $0x28] sm:$0xff]
  %v842 = vld [vmem:[#allocation2 + $0x30] sm:$0xff]
  %v843 = vld [vmem:[#allocation2 + $0x38] sm:$0xff]
  %v844 = vld [vmem:[#allocation2 + $0x40] sm:$0xff]
  %v845 = vld [vmem:[#allocation2 + $0x48] sm:$0xff]
  %v846 = vld [vmem:[#allocation2 + $0x50] sm:$0xff]
  %v847 = vld [vmem:[#allocation2 + $0x58] sm:$0xff]
  %v848 = vld [vmem:[#allocation2 + $0x60] sm:$0xff]
  %v849 = vld [vmem:[#allocation2 + $0x68] sm:$0xff]
  %v850 = vld [vmem:[#allocation2 + $0x70] sm:$0xff]
  %v851 = vld [vmem:[#allocation2 + $0x78] sm:$0xff]
  %v852 = vld [vmem:[#allocation2 + $0x80] sm:$0xff]
  %v853 = vld [vmem:[#allocation2 + $0x88] sm:$0xff]
  %v854 = vld [vmem:[#allocation2 + $0x90] sm:$0xff]
  %v855 = vld [vmem:[#allocation2 + $0x98] sm:$0xff]
  %v856 = vld [vmem:[#allocation2 + $0xa0] sm:$0xff]
  %v857 = vld [vmem:[#allocation2 + $0xa8] sm:$0xff]
  %v858 = vld [vmem:[#allocation2 + $0xb0] sm:$0xff]
  %v859 = vld [vmem:[#allocation2 + $0xb8] sm:$0xff]
  %v860 = vld [vmem:[#allocation2 + $0xc0] sm:$0xff]
  %v861 = vld [vmem:[#allocation2 + $0xc8] sm:$0xff]
  %v862 = vld [vmem:[#allocation2 + $0xd0] sm:$0xff]
  %v863 = vld [vmem:[#allocation2 + $0xd8] sm:$0xff]
  %v864 = vld [vmem:[#allocation2 + $0xe0] sm:$0xff]
  %v865 = vld [vmem:[#allocation2 + $0xe8] sm:$0xff]
  %v866 = vld [vmem:[#allocation2 + $0xf0] sm:$0xff]
  %v867 = vld [vmem:[#allocation2 + $0xf8] sm:$0xff]
  %v868 = vld [vmem:[#allocation2 + $0x100] sm:$0xff]
  %v869 = vld [vmem:[#allocation2 + $0x108] sm:$0xff]
  %v870 = vld [vmem:[#allocation2 + $0x110] sm:$0xff]
  %v871 = vld [vmem:[#allocation2 + $0x118] sm:$0xff]
  %v872 = vld [vmem:[%s4] sm:$0xf]
  %874 = vset.pattern.permute.xlu0 0
  %875 = vperm.xlu0 %874, %v872
  %v876 = vpop.permute.xlu0 %875
  %vm878 = vcmask 588800
  %v880 = vsel %vm878, %v835, 0
  %882 = vmatprep.subr.mxu0 0.0
  %883 = vmatpush1.msra.mxu0 0.0
  %884 = vmatprep.subr.mxu0 0.0
  %885 = vmatpush1.msra.mxu0 0.0
  %886 = vmatprep.subr.mxu0 0.0
  %887 = vmatpush1.msra.mxu0 0.0
  %888 = vmatprep.subr.mxu0 0.0
  %889 = vmatpush1.msra.mxu0 0.0
  %890 = vmatprep.subr.mxu0 0.0
  %891 = vmatpush1.msra.mxu0 0.0
  %892 = vmatprep.subr.mxu0 0.0
  %893 = vmatpush1.msra.mxu0 0.0
  %894 = vmatprep.subr.mxu0 0.0
  %895 = vmatpush1.msra.mxu0 0.0
  %896 = vmatprep.subr.mxu0 %v869
  %897 = vmatpush1.msra.mxu0 %v868
  %898 = vmatprep.subr.mxu0 %v865
  %899 = vmatpush1.msra.mxu0 %v864
  %900 = vmatprep.subr.mxu0 %v861
  %901 = vmatpush1.msra.mxu0 %v860
  %902 = vmatprep.subr.mxu0 %v857
  %903 = vmatpush1.msra.mxu0 %v856
  %904 = vmatprep.subr.mxu0 %v853
  %905 = vmatpush1.msra.mxu0 %v852
  %906 = vmatprep.subr.mxu0 %v849
  %907 = vmatpush1.msra.mxu0 %v848
  %908 = vmatprep.subr.mxu0 %v845
  %909 = vmatpush1.msra.mxu0 %v844
  %910 = vmatprep.subr.mxu0 %v841
  %911 = vmatpush1.msra.mxu0 %v840
  %912 = vmatprep.subr.mxu0 %v837
  %913 = vmatpush1.msra.mxu0 %v836
  %914 = vmatprep.subr.mxu0 0.0
  %915 = vmatpush2.msra.mxu0 0.0
  %916 = vmatprep.subr.mxu0 0.0
  %917 = vmatpush2.msra.mxu0 0.0
  %918 = vmatprep.subr.mxu0 0.0
  %919 = vmatpush2.msra.mxu0 0.0
  %920 = vmatprep.subr.mxu0 0.0
  %921 = vmatpush2.msra.mxu0 0.0
  %922 = vmatprep.subr.mxu0 0.0
  %923 = vmatpush2.msra.mxu0 0.0
  %924 = vmatprep.subr.mxu0 0.0
  %925 = vmatpush2.msra.mxu0 0.0
  %926 = vmatprep.subr.mxu0 0.0
  %927 = vmatpush2.msra.mxu0 0.0
  %928 = vmatprep.subr.mxu0 0.0
  %929 = vmatpush2.msra.mxu0 0.0
  %930 = vmatprep.subr.mxu0 0.0
  %931 = vmatpush2.msra.mxu0 0.0
  %932 = vmatprep.subr.mxu0 0.0
  %933 = vmatpush2.msra.mxu0 0.0
  %934 = vmatprep.subr.mxu0 0.0
  %935 = vmatpush2.msra.mxu0 0.0
  %936 = vmatprep.subr.mxu0 0.0
  %937 = vmatpush2.msra.mxu0 0.0
  %938 = vmatprep.subr.mxu0 0.0
  %939 = vmatpush2.msra.mxu0 0.0
  %940 = vmatprep.subr.mxu0 0.0
  %941 = vmatpush2.msra.mxu0 0.0
  %942 = vmatprep.subr.mxu0 0.0
  %943 = vmatpush2.msra.mxu0 0.0
  %944 = vmatprep.subr.mxu0 0.0
  %945 = vmatpush2.msra.mxu0 0.0
  %946 = vmatprep.mubr.f32.mxu0 0.0
  %947 = vmatmul.mubr.f32.gmra.mxu0 %v880
  %v948 = vpop.f32.mrf.mxu0
  %v949 = vadd.f32 %v876, %v948
  %v950 = vpop.f32.mrf.mxu0
  %v951 = vadd.f32 %v876, %v950
  %952 = vdwg.mxu0
  %953 = vmatprep.subr.mxu0 0.0
  %954 = vmatpush1.msra.mxu0 0.0
  %955 = vmatprep.subr.mxu0 0.0
  %956 = vmatpush1.msra.mxu0 0.0
  %957 = vmatprep.subr.mxu0 0.0
  %958 = vmatpush1.msra.mxu0 0.0
  %959 = vmatprep.subr.mxu0 0.0
  %960 = vmatpush1.msra.mxu0 0.0
  %961 = vmatprep.subr.mxu0 0.0
  %962 = vmatpush1.msra.mxu0 0.0
  %963 = vmatprep.subr.mxu0 0.0
  %964 = vmatpush1.msra.mxu0 0.0
  %965 = vmatprep.subr.mxu0 0.0
  %966 = vmatpush1.msra.mxu0 0.0
  %967 = vmatprep.subr.mxu0 %v871
  %968 = vmatpush1.msra.mxu0 %v870
  %969 = vmatprep.subr.mxu0 %v867
  %970 = vmatpush1.msra.mxu0 %v866
  %971 = vmatprep.subr.mxu0 %v863
  %972 = vmatpush1.msra.mxu0 %v862
  %973 = vmatprep.subr.mxu0 %v859
  %974 = vmatpush1.msra.mxu0 %v858
  %975 = vmatprep.subr.mxu0 %v855
  %976 = vmatpush1.msra.mxu0 %v854
  %977 = vmatprep.subr.mxu0 %v851
  %978 = vmatpush1.msra.mxu0 %v850
  %979 = vmatprep.subr.mxu0 %v847
  %980 = vmatpush1.msra.mxu0 %v846
  %981 = vmatprep.subr.mxu0 %v843
  %982 = vmatpush1.msra.mxu0 %v842
  %983 = vmatprep.subr.mxu0 %v839
  %984 = vmatpush1.msra.mxu0 %v838
  %985 = vmatprep.subr.mxu0 0.0
  %986 = vmatpush2.msra.mxu0 0.0
  %987 = vmatprep.subr.mxu0 0.0
  %988 = vmatpush2.msra.mxu0 0.0
  %989 = vmatprep.subr.mxu0 0.0
  %990 = vmatpush2.msra.mxu0 0.0
  %991 = vmatprep.subr.mxu0 0.0
  %992 = vmatpush2.msra.mxu0 0.0
  %993 = vmatprep.subr.mxu0 0.0
  %994 = vmatpush2.msra.mxu0 0.0
  %995 = vmatprep.subr.mxu0 0.0
  %996 = vmatpush2.msra.mxu0 0.0
  %997 = vmatprep.subr.mxu0 0.0
  %998 = vmatpush2.msra.mxu0 0.0
  %999 = vmatprep.subr.mxu0 0.0
  %1000 = vmatpush2.msra.mxu0 0.0
  %1001 = vmatprep.subr.mxu0 0.0
  %1002 = vmatpush2.msra.mxu0 0.0
  %1003 = vmatprep.subr.mxu0 0.0
  %1004 = vmatpush2.msra.mxu0 0.0
  %1005 = vmatprep.subr.mxu0 0.0
  %1006 = vmatpush2.msra.mxu0 0.0
  %1007 = vmatprep.subr.mxu0 0.0
  %1008 = vmatpush2.msra.mxu0 0.0
  %1009 = vmatprep.subr.mxu0 0.0
  %1010 = vmatpush2.msra.mxu0 0.0
  %1011 = vmatprep.subr.mxu0 0.0
  %1012 = vmatpush2.msra.mxu0 0.0
  %1013 = vmatprep.subr.mxu0 0.0
  %1014 = vmatpush2.msra.mxu0 0.0
  %1015 = vmatprep.subr.mxu0 0.0
  %1016 = vmatpush2.msra.mxu0 0.0
  %1017 = vmatprep.mubr.f32.mxu0 0.0
  %1018 = vmatmul.mubr.f32.gmra.mxu0 %v880
  %v1019 = vpop.f32.mrf.mxu0
  %v1020 = vadd.f32 %v876, %v1019
  %v1021 = vpop.f32.mrf.mxu0
  %v1022 = vadd.f32 %v876, %v1021
  %1023 = vdwg.mxu0
  %v1024 = vmax.f32 %v949, 0.0
  %v1025 = vmax.f32 %v951, 0.0
  %v1026 = vmax.f32 %v1020, 0.0
  %v1027 = vmax.f32 %v1022, 0.0
  %v1028 = vld [vmem:[%s5] sm:$0x7]
  %v1029 = vld [vmem:[%s6] sm:$0x7]
  %1031 = vset.pattern.permute.xlu0 0
  %1032 = vperm.xlu0 %1031, %v1029
  %v1033 = vpop.permute.xlu0 %1032
  %v1036 = vsel %vm147, %v1028, 0
  %v1039 = vsel %vm154, %v1024, 0
  %v1042 = vsel %vm154, %v1025, 0
  %v1045 = vsel %vm154, %v1026, 0
  %v1048 = vsel %vm154, %v1027, 0
  %1050 = vmatprep.subr.mxu0 0.0
  %1051 = vmatpush1.msra.mxu0 0.0
  %1052 = vmatprep.subr.mxu0 0.0
  %1053 = vmatpush1.msra.mxu0 0.0
  %1054 = vmatprep.subr.mxu0 0.0
  %1055 = vmatpush1.msra.mxu0 0.0
  %1056 = vmatprep.subr.mxu0 0.0
  %1057 = vmatpush1.msra.mxu0 0.0
  %1058 = vmatprep.subr.mxu0 0.0
  %1059 = vmatpush1.msra.mxu0 0.0
  %1060 = vmatprep.subr.mxu0 0.0
  %1061 = vmatpush1.msra.mxu0 0.0
  %1062 = vmatprep.subr.mxu0 0.0
  %1063 = vmatpush1.msra.mxu0 0.0
  %1064 = vmatprep.subr.mxu0 0.0
  %1065 = vmatpush1.msra.mxu0 0.0
  %1066 = vmatprep.subr.mxu0 0.0
  %1067 = vmatpush1.msra.mxu0 0.0
  %1068 = vmatprep.subr.mxu0 0.0
  %1069 = vmatpush1.msra.mxu0 0.0
  %1070 = vmatprep.subr.mxu0 0.0
  %1071 = vmatpush1.msra.mxu0 0.0
  %1072 = vmatprep.subr.mxu0 0.0
  %1073 = vmatpush1.msra.mxu0 0.0
  %1074 = vmatprep.subr.mxu0 0.0
  %1075 = vmatpush1.msra.mxu0 0.0
  %1076 = vmatprep.subr.mxu0 0.0
  %1077 = vmatpush1.msra.mxu0 0.0
  %1078 = vmatprep.subr.mxu0 0.0
  %1079 = vmatpush1.msra.mxu0 0.0
  %1080 = vmatprep.subr.mxu0 %v1042
  %1081 = vmatpush1.msra.mxu0 %v1039
  %1082 = vmatprep.subr.mxu0 0.0
  %1083 = vmatpush2.msra.mxu0 0.0
  %1084 = vmatprep.subr.mxu0 0.0
  %1085 = vmatpush2.msra.mxu0 0.0
  %1086 = vmatprep.subr.mxu0 0.0
  %1087 = vmatpush2.msra.mxu0 0.0
  %1088 = vmatprep.subr.mxu0 0.0
  %1089 = vmatpush2.msra.mxu0 0.0
  %1090 = vmatprep.subr.mxu0 0.0
  %1091 = vmatpush2.msra.mxu0 0.0
  %1092 = vmatprep.subr.mxu0 0.0
  %1093 = vmatpush2.msra.mxu0 0.0
  %1094 = vmatprep.subr.mxu0 0.0
  %1095 = vmatpush2.msra.mxu0 0.0
  %1096 = vmatprep.subr.mxu0 0.0
  %1097 = vmatpush2.msra.mxu0 0.0
  %1098 = vmatprep.subr.mxu0 0.0
  %1099 = vmatpush2.msra.mxu0 0.0
  %1100 = vmatprep.subr.mxu0 0.0
  %1101 = vmatpush2.msra.mxu0 0.0
  %1102 = vmatprep.subr.mxu0 0.0
  %1103 = vmatpush2.msra.mxu0 0.0
  %1104 = vmatprep.subr.mxu0 0.0
  %1105 = vmatpush2.msra.mxu0 0.0
  %1106 = vmatprep.subr.mxu0 0.0
  %1107 = vmatpush2.msra.mxu0 0.0
  %1108 = vmatprep.subr.mxu0 0.0
  %1109 = vmatpush2.msra.mxu0 0.0
  %1110 = vmatprep.subr.mxu0 0.0
  %1111 = vmatpush2.msra.mxu0 0.0
  %1112 = vmatprep.subr.mxu0 0.0
  %1113 = vmatpush2.msra.mxu0 0.0
  %1114 = vmatprep.mubr.f32.mxu0 0.0
  %1115 = vmatmul.mubr.f32.gmra.mxu0 %v1036
  %v1116 = vpop.f32.mrf.mxu0
  %v1117 = vadd.f32 %v1033, %v1116
  %v1118 = vpop.f32.mrf.mxu0
  %v1119 = vadd.f32 %v1033, %v1118
  %1120 = vdwg.mxu0
  %1121 = vmatprep.subr.mxu0 0.0
  %1122 = vmatpush1.msra.mxu0 0.0
  %1123 = vmatprep.subr.mxu0 0.0
  %1124 = vmatpush1.msra.mxu0 0.0
  %1125 = vmatprep.subr.mxu0 0.0
  %1126 = vmatpush1.msra.mxu0 0.0
  %1127 = vmatprep.subr.mxu0 0.0
  %1128 = vmatpush1.msra.mxu0 0.0
  %1129 = vmatprep.subr.mxu0 0.0
  %1130 = vmatpush1.msra.mxu0 0.0
  %1131 = vmatprep.subr.mxu0 0.0
  %1132 = vmatpush1.msra.mxu0 0.0
  %1133 = vmatprep.subr.mxu0 0.0
  %1134 = vmatpush1.msra.mxu0 0.0
  %1135 = vmatprep.subr.mxu0 0.0
  %1136 = vmatpush1.msra.mxu0 0.0
  %1137 = vmatprep.subr.mxu0 0.0
  %1138 = vmatpush1.msra.mxu0 0.0
  %1139 = vmatprep.subr.mxu0 0.0
  %1140 = vmatpush1.msra.mxu0 0.0
  %1141 = vmatprep.subr.mxu0 0.0
  %1142 = vmatpush1.msra.mxu0 0.0
  %1143 = vmatprep.subr.mxu0 0.0
  %1144 = vmatpush1.msra.mxu0 0.0
  %1145 = vmatprep.subr.mxu0 0.0
  %1146 = vmatpush1.msra.mxu0 0.0
  %1147 = vmatprep.subr.mxu0 0.0
  %1148 = vmatpush1.msra.mxu0 0.0
  %1149 = vmatprep.subr.mxu0 0.0
  %1150 = vmatpush1.msra.mxu0 0.0
  %1151 = vmatprep.subr.mxu0 %v1048
  %1152 = vmatpush1.msra.mxu0 %v1045
  %1153 = vmatprep.subr.mxu0 0.0
  %1154 = vmatpush2.msra.mxu0 0.0
  %1155 = vmatprep.subr.mxu0 0.0
  %1156 = vmatpush2.msra.mxu0 0.0
  %1157 = vmatprep.subr.mxu0 0.0
  %1158 = vmatpush2.msra.mxu0 0.0
  %1159 = vmatprep.subr.mxu0 0.0
  %1160 = vmatpush2.msra.mxu0 0.0
  %1161 = vmatprep.subr.mxu0 0.0
  %1162 = vmatpush2.msra.mxu0 0.0
  %1163 = vmatprep.subr.mxu0 0.0
  %1164 = vmatpush2.msra.mxu0 0.0
  %1165 = vmatprep.subr.mxu0 0.0
  %1166 = vmatpush2.msra.mxu0 0.0
  %1167 = vmatprep.subr.mxu0 0.0
  %1168 = vmatpush2.msra.mxu0 0.0
  %1169 = vmatprep.subr.mxu0 0.0
  %1170 = vmatpush2.msra.mxu0 0.0
  %1171 = vmatprep.subr.mxu0 0.0
  %1172 = vmatpush2.msra.mxu0 0.0
  %1173 = vmatprep.subr.mxu0 0.0
  %1174 = vmatpush2.msra.mxu0 0.0
  %1175 = vmatprep.subr.mxu0 0.0
  %1176 = vmatpush2.msra.mxu0 0.0
  %1177 = vmatprep.subr.mxu0 0.0
  %1178 = vmatpush2.msra.mxu0 0.0
  %1179 = vmatprep.subr.mxu0 0.0
  %1180 = vmatpush2.msra.mxu0 0.0
  %1181 = vmatprep.subr.mxu0 0.0
  %1182 = vmatpush2.msra.mxu0 0.0
  %1183 = vmatprep.subr.mxu0 0.0
  %1184 = vmatpush2.msra.mxu0 0.0
  %1185 = vmatprep.mubr.f32.mxu0 0.0
  %1186 = vmatmul.mubr.f32.gmra.mxu0 %v1036
  %v1187 = vpop.f32.mrf.mxu0
  %v1188 = vadd.f32 %v1033, %v1187
  %v1189 = vpop.f32.mrf.mxu0
  %v1190 = vadd.f32 %v1033, %v1189
  %1191 = vdwg.mxu0
  %v1194 = vcombine.low %v1117, %v1119
  %1196 = vst [vmem:[%s7] sm:$0x77] %v1194
  %v1199 = vcombine.low %v1188, %v1190
  %s1201 = scalar_lea.vmem %s7, 8
  %1202 = vst [vmem:[%s1201] sm:$0x77] %v1199
  // Predicated region
  $region30: #{tpu_custom_call.1} parent=0 // pred_check
    _
  $region31: #{tpu_custom_call.1} parent=0 // pred_check_branch
    %1204 = sbr.rel (0) target = $region33
  $region32: #{tpu_custom_call.1} parent=0 // pred_region
    _
  $region33: #{tpu_custom_call.1} parent=0 // pred_fallthru
    _
  // Predicated region
  $region34: #{tpu_custom_call.1} parent=0 // pred_check
    _
  $region35: #{tpu_custom_call.1} parent=0 // pred_check_branch
    %1206 = sbr.rel (0) target = $region37
  $region36: #{tpu_custom_call.1} parent=0 // pred_region
    _
  $region37: #{tpu_custom_call.1} parent=0 // pred_fallthru
    _

</llo_original>
